<compile_context>
chip_gen: v7x
topology: tpu7x:2x2x1
jax: 0.10.0
libtpu: 0.0.40
codegen_flags: <defaults>
</compile_context>

<pallas_src>
import functools
import math

import jax
import jax.numpy as jnp
from jax import lax
from jax.experimental import pallas as pl
from jax.experimental.pallas import tpu as pltpu


def gru_chunk_kernel(x_ref, h0_ref, wx_ref, wh_ref, b_ref, out_ref,
                     h_scr, gx_scr, *, H, C, T, compute_dtype):
    """One grid step == one chunk of C GRU time steps.

    x_ref   : VMEM (C, H)   embedding rows for this chunk (pipelined per chunk)
    h0_ref  : VMEM (1, H)   initial hidden state (resident across chunks)
    wx_ref  : VMEM (H, 3H)  W_ih^T, gate order [r|z|n] (resident, bf16/f32)
    wh_ref  : VMEM (H, 3H)  W_hh^T (resident, bf16/f32)
    b_ref   : VMEM (2, 3H)  row 0 = b_ih, row 1 = b_hh (f32)
    out_ref : VMEM (C, H)   hidden state after each step of the chunk
    h_scr   : VMEM (1, H)   f32 hidden-state carry across chunks
    gx_scr  : VMEM (C, 3H)  f32 chunk-wide input-projection buffer
    """
    c = pl.program_id(0)

    @pl.when(c == 0)
    def _():
        h_scr[...] = h0_ref[...].astype(jnp.float32)

    # Hoisted input projection for the whole chunk: one MXU matmul (C,H)@(H,3H)
    # with f32 accumulation; b_ih is folded in here.
    gx_scr[...] = (
        jnp.dot(x_ref[...], wx_ref[...], preferred_element_type=jnp.float32)
        + b_ref[0:1, :]
    )

    bh = b_ref[1:2, :]            # (1, 3H) f32
    h_carry = h_scr[...]          # (1, H)  f32

    full_chunk = (T % C) == 0     # static (trace-time) condition

    def step(t, h):
        # Recurrent half: (1,H)@(H,3H) on the MXU, f32 accumulate.
        gh = jnp.dot(h.astype(compute_dtype), wh_ref[...],
                     preferred_element_type=jnp.float32) + bh
        g = gx_scr[pl.ds(t, 1), :]                           # (1, 3H), has b_ih
        # H is a multiple of 128 at the module's default size, so these lane
        # slices are vreg-aligned (no XLU relayout).
        r = jax.nn.sigmoid(g[:, 0:H] + gh[:, 0:H])
        z = jax.nn.sigmoid(g[:, H:2 * H] + gh[:, H:2 * H])
        n = jnp.tanh(g[:, 2 * H:3 * H] + r * gh[:, 2 * H:3 * H])
        h_new = (1.0 - z) * n + z * h                        # PyTorch GRU update
        if not full_chunk:                                   # mask padded tail
            h_new = jnp.where((c * C + t) < T, h_new, h)
        out_ref[pl.ds(t, 1), :] = h_new                      # VMEM store; HBM
        return h_new                                         # writeback is dense

    unroll = True if C <= 16 else 8
    h_final = lax.fori_loop(0, C, step, h_carry, unroll=unroll)
    h_scr[...] = h_final


def prepare_params(emb, w_ih, w_hh, b_ih, b_hh, compute_dtype=jnp.bfloat16):
    """One-time parameter prep (transposes / casts hoisted out of the kernel).

    emb  : (V, H)  embedding.weight
    w_ih : (3H, H) gru.weight_ih_l0 (gate order r|z|n)
    w_hh : (3H, H) gru.weight_hh_l0
    b_ih : (3H,)   gru.bias_ih_l0
    b_hh : (3H,)   gru.bias_hh_l0
    compute_dtype: MXU input dtype for weights/embeddings (bf16 recommended);
                   biases, activations and the hidden carry stay f32.
    """
    H = w_ih.shape[1]
    return {
        "emb": emb.astype(compute_dtype),                    # (V, H)
        "wx": jnp.transpose(w_ih).astype(compute_dtype),     # (H, 3H)
        "wh": jnp.transpose(w_hh).astype(compute_dtype),     # (H, 3H)
        "b": jnp.stack([b_ih, b_hh]).astype(jnp.float32),    # (2, 3H)
        "H": H,
        "compute_dtype": compute_dtype,
    }


def _vmem_limit_bytes(C, H, compute_dtype):
    """Scoped-VMEM request derived from actual buffer sizes (2x for pipelining)."""
    e = jnp.dtype(compute_dtype).itemsize
    f = 4
    double_buffered = 2 * (C * H * e              # x chunk
                           + H * f                # h0
                           + 2 * H * 3 * H * e    # wx, wh
                           + 2 * 3 * H * f        # biases
                           + C * H * f)           # output chunk
    scratch = H * f + C * 3 * H * f
    return max(16 * 1024 * 1024,
               int(1.5 * (double_buffered + scratch)) + 4 * 1024 * 1024)


def encoder_rnn2_encode(tokens, hidden0, params, *, max_chunk=64):
    """Run the GRU over a whole token sequence in ONE pallas_call.

    tokens  : (T,) int token ids
    hidden0 : (1, 1, H) float32 initial hidden state
    returns (outputs, hidden): outputs (T,1,1,H) per-step GRU outputs,
            hidden (1,1,H) final hidden state (== outputs[-1]).
    """
    H = params["H"]
    cdt = params["compute_dtype"]
    T = int(tokens.shape[0])

    if T <= max_chunk:
        C, Tpad = T, T                       # single chunk, block == full array
    else:
        assert max_chunk % 16 == 0           # sublane-tile friendly for bf16/f32
        C = max_chunk
        Tpad = ((T + C - 1) // C) * C
    n_chunks = Tpad // C

    # Embedding gather for the whole sequence: one XLA gather, then the rows
    # stream into the kernel as ordinary pipelined (C,H) blocks.
    x = jnp.take(params["emb"], tokens.astype(jnp.int32), axis=0)    # (T, H)
    if Tpad != T:
        x = jnp.concatenate([x, jnp.zeros((Tpad - T, H), x.dtype)], axis=0)
    h0 = hidden0.reshape(1, H).astype(jnp.float32)

    kernel = functools.partial(gru_chunk_kernel, H=H, C=C, T=T, compute_dtype=cdt)

    grid_spec = pltpu.PrefetchScalarGridSpec(
        num_scalar_prefetch=0,
        grid=(n_chunks,),
        in_specs=[
            pl.BlockSpec((C, H), lambda c: (c, 0)),          # x (pipelined)
            pl.BlockSpec((1, H), lambda c: (0, 0)),          # h0 (resident)
            pl.BlockSpec((H, 3 * H), lambda c: (0, 0)),      # W_ih^T (resident)
            pl.BlockSpec((H, 3 * H), lambda c: (0, 0)),      # W_hh^T (resident)
            pl.BlockSpec((2, 3 * H), lambda c: (0, 0)),      # biases (resident)
        ],
        out_specs=pl.BlockSpec((C, H), lambda c: (c, 0)),
        scratch_shapes=[
            pltpu.VMEM((1, H), jnp.float32),                 # hidden carry
            pltpu.VMEM((C, 3 * H), jnp.float32),             # chunk projection
        ],
    )

    out = pl.pallas_call(
        kernel,
        out_shape=jax.ShapeDtypeStruct((Tpad, H), jnp.float32),
        grid_spec=grid_spec,
        compiler_params=pltpu.CompilerParams(
            # The chunk axis carries the hidden state -> must stay sequential.
            dimension_semantics=("arbitrary",),
            vmem_limit_bytes=_vmem_limit_bytes(C, H, cdt),
        ),
    )(x, h0, params["wx"], params["wh"], params["b"])

    outputs = out[:T].reshape(T, 1, 1, H)
    hidden = out[T - 1].reshape(1, 1, H)
    return outputs, hidden


def encoder_rnn2_forward(token, hidden, params):
    """Pallas equivalent of EncoderRNN2.forward(input, hidden): one token step.

    token : (1,) int token index; hidden : (1,1,H).  Returns (output, hidden),
    each (1,1,H), matching the PyTorch module.
    """
    outputs, hidden_new = encoder_rnn2_encode(token.reshape(1), hidden, params)
    return outputs[0], hidden_new


# ----------------------------- pure-JAX reference -----------------------------
def _reference_step(tok, h, emb, w_ih, w_hh, b_ih, b_hh):
    """Matches torch.nn.GRU single-step semantics exactly (f32)."""
    H = h.shape[-1]
    x = emb[tok].reshape(1, H)
    h = h.reshape(1, H)
    gi = x @ w_ih.T + b_ih
    gh = h @ w_hh.T + b_hh
    i_r, i_z, i_n = gi[:, :H], gi[:, H:2 * H], gi[:, 2 * H:]
    h_r, h_z, h_n = gh[:, :H], gh[:, H:2 * H], gh[:, 2 * H:]
    r = jax.nn.sigmoid(i_r + h_r)
    z = jax.nn.sigmoid(i_z + h_z)
    n = jnp.tanh(i_n + r * h_n)
    return (1.0 - z) * n + z * h


def _reference_seq(tokens, hidden0, emb, w_ih, w_hh, b_ih, b_hh):
    H = hidden0.shape[-1]
    h = hidden0.reshape(1, H)
    outs = []
    for t in range(tokens.shape[0]):
        h = _reference_step(int(tokens[t]), h, emb, w_ih, w_hh, b_ih, b_hh)
        outs.append(h)
    return jnp.stack(outs).reshape(-1, 1, 1, H)


if __name__ == "__main__":
    VOCAB = 64
    HIDDEN = 128      # lane-aligned (multiple of 128); the module default is 512
    SEQ = 8

    key = jax.random.PRNGKey(0)
    k_emb, k_wih, k_whh, k_bih, k_bhh, k_h, k_tok, k_tok2 = jax.random.split(key, 8)
    bound = 1.0 / math.sqrt(HIDDEN)

    # Deterministic synthetic parameters (shapes match nn.Embedding / nn.GRU).
    emb = jax.random.normal(k_emb, (VOCAB, HIDDEN), jnp.float32)
    w_ih = jax.random.uniform(k_wih, (3 * HIDDEN, HIDDEN), jnp.float32, -bound, bound)
    w_hh = jax.random.uniform(k_whh, (3 * HIDDEN, HIDDEN), jnp.float32, -bound, bound)
    b_ih = jax.random.uniform(k_bih, (3 * HIDDEN,), jnp.float32, -bound, bound)
    b_hh = jax.random.uniform(k_bhh, (3 * HIDDEN,), jnp.float32, -bound, bound)

    params_bf16 = prepare_params(emb, w_ih, w_hh, b_ih, b_hh, jnp.bfloat16)
    params_f32 = prepare_params(emb, w_ih, w_hh, b_ih, b_hh, jnp.float32)

    tokens = jax.random.randint(k_tok, (SEQ,), 0, VOCAB, jnp.int32)
    # initHidden() is zeros; use a nonzero hidden to exercise the carry path.
    hidden0 = jax.random.normal(k_h, (1, 1, HIDDEN), jnp.float32)

    ref_outs = _reference_seq(tokens, hidden0, emb, w_ih, w_hh, b_ih, b_hh)

    # --- full-sequence kernel, f32 params: checks the recurrence math tightly ---
    outs32, hid32 = jax.block_until_ready(
        encoder_rnn2_encode(tokens, hidden0, params_f32))
    assert outs32.shape == (SEQ, 1, 1, HIDDEN) and hid32.shape == (1, 1, HIDDEN)
    assert jnp.allclose(outs32, ref_outs, atol=1e-3, rtol=1e-3)
    assert jnp.allclose(hid32, ref_outs[-1].reshape(1, 1, HIDDEN), atol=1e-3, rtol=1e-3)

    # --- full-sequence kernel, bf16 params (default perf config) ---
    outs16, hid16 = jax.block_until_ready(
        encoder_rnn2_encode(tokens, hidden0, params_bf16))
    assert jnp.allclose(outs16, ref_outs, atol=5e-2, rtol=5e-2)
    assert jnp.allclose(hid16, ref_outs[-1].reshape(1, 1, HIDDEN), atol=5e-2, rtol=5e-2)

    # --- multi-chunk + masked-tail path (T not a multiple of the chunk size) ---
    T_LONG = 40
    tokens_long = jax.random.randint(k_tok2, (T_LONG,), 0, VOCAB, jnp.int32)
    outs_l, hid_l = jax.block_until_ready(
        encoder_rnn2_encode(tokens_long, hidden0, params_f32, max_chunk=16))
    ref_l = _reference_seq(tokens_long, hidden0, emb, w_ih, w_hh, b_ih, b_hh)
    assert outs_l.shape == (T_LONG, 1, 1, HIDDEN)
    assert jnp.allclose(outs_l, ref_l, atol=1e-3, rtol=1e-3)
    assert jnp.allclose(hid_l, ref_l[-1].reshape(1, 1, HIDDEN), atol=1e-3, rtol=1e-3)

    # --- single-step forward(), exactly matching the PyTorch module signature ---
    out1, h1 = jax.block_until_ready(
        encoder_rnn2_forward(tokens[:1], hidden0, params_bf16))
    ref_h1 = _reference_step(int(tokens[0]), hidden0, emb, w_ih, w_hh, b_ih, b_hh)
    assert out1.shape == (1, 1, HIDDEN) and h1.shape == (1, 1, HIDDEN)
    assert jnp.allclose(out1, ref_h1.reshape(1, 1, HIDDEN), atol=5e-2, rtol=5e-2)
    assert jnp.allclose(h1, ref_h1.reshape(1, 1, HIDDEN), atol=5e-2, rtol=5e-2)

    print("KERNEL_OK")
</pallas_src>

<mosaic_0001>
module attributes {stable_mosaic.version = 11 : i64} {
  func.func @gru_chunk_kernel(%arg0: i32, %arg1: memref<8x128xf32, #tpu.memory_space<vmem>>, %arg2: memref<1x128xf32, #tpu.memory_space<vmem>>, %arg3: memref<128x384xf32, #tpu.memory_space<vmem>>, %arg4: memref<128x384xf32, #tpu.memory_space<vmem>>, %arg5: memref<2x384xf32, #tpu.memory_space<vmem>>, %arg6: memref<8x128xf32, #tpu.memory_space<vmem>>, %arg7: memref<1x128xf32, #tpu.memory_space<vmem>>, %arg8: memref<8x384xf32, #tpu.memory_space<vmem>>) attributes {dimension_semantics = [#tpu.dimension_semantics<arbitrary>], iteration_bounds = array<i64: 1>, scalar_prefetch = 0 : i64, scratch_operands = 2 : i64, tpu.core_type = #tpu.core_type<tc>, window_params = [{transform_indices = @transform_0, window_bounds = array<i64: 8, 128>}, {pipeline_mode = #tpu.pipeline_mode<synchronous>, transform_indices = @transform_1, window_bounds = array<i64: 1, 128>}, {pipeline_mode = #tpu.pipeline_mode<synchronous>, transform_indices = @transform_2, window_bounds = array<i64: 128, 384>}, {pipeline_mode = #tpu.pipeline_mode<synchronous>, transform_indices = @transform_3, window_bounds = array<i64: 128, 384>}, {pipeline_mode = #tpu.pipeline_mode<synchronous>, transform_indices = @transform_4, window_bounds = array<i64: 2, 384>}, {transform_indices = @transform_5, window_bounds = array<i64: 8, 128>}]} {
    %c0_i32 = arith.constant 0 : i32
    %0 = arith.cmpi eq, %arg0, %c0_i32 : i32
    %1 = arith.extui %0 : i1 to i32
    %c0_i32_0 = arith.constant 0 : i32
    %2 = arith.cmpi ne, %1, %c0_i32_0 : i32
    scf.if %2 {
      %c0_78 = arith.constant 0 : index
      %c0_79 = arith.constant 0 : index
      %277 = vector.load %arg2[%c0_78, %c0_79] : memref<1x128xf32, #tpu.memory_space<vmem>>, vector<1x128xf32>
      %c0_80 = arith.constant 0 : index
      %c0_81 = arith.constant 0 : index
      %278 = vector.load %arg7[%c0_80, %c0_81] : memref<1x128xf32, #tpu.memory_space<vmem>>, vector<1x128xf32>
      tpu.vector_store %arg7[%c0_80, %c0_81], %277 {strides = array<i32>} : memref<1x128xf32, #tpu.memory_space<vmem>>, vector<1x128xf32>,
    } else {
    }
    %c0 = arith.constant 0 : index
    %c0_1 = arith.constant 0 : index
    %3 = vector.load %arg1[%c0, %c0_1] : memref<8x128xf32, #tpu.memory_space<vmem>>, vector<8x128xf32>
    %c0_2 = arith.constant 0 : index
    %c0_3 = arith.constant 0 : index
    %4 = vector.load %arg3[%c0_2, %c0_3] : memref<128x384xf32, #tpu.memory_space<vmem>>, vector<128x384xf32>
    %cst = arith.constant dense<0.000000e+00> : vector<8x384xf32>
    %5 = tpu.matmul %3, %4, %cst {dimension_numbers = #tpu.dot_dimension_numbers<[1], [0], [0], [1], [0, 0, 1, 1], [], []>} : vector<8x128xf32>, vector<128x384xf32>, vector<8x384xf32> -> vector<8x384xf32>
    %c0_4 = arith.constant 0 : index
    %c0_5 = arith.constant 0 : index
    %6 = vector.load %arg5[%c0_4, %c0_5] : memref<2x384xf32, #tpu.memory_space<vmem>>, vector<1x384xf32>
    %7 = vector.broadcast %6 : vector<1x384xf32> to vector<8x384xf32>
    %8 = arith.addf %5, %7 : vector<8x384xf32>
    %c0_6 = arith.constant 0 : index
    %c0_7 = arith.constant 0 : index
    %9 = vector.load %arg8[%c0_6, %c0_7] : memref<8x384xf32, #tpu.memory_space<vmem>>, vector<8x384xf32>
    tpu.vector_store %arg8[%c0_6, %c0_7], %8 {strides = array<i32>} : memref<8x384xf32, #tpu.memory_space<vmem>>, vector<8x384xf32>,
    %c1 = arith.constant 1 : index
    %c0_8 = arith.constant 0 : index
    %10 = vector.load %arg5[%c1, %c0_8] : memref<2x384xf32, #tpu.memory_space<vmem>>, vector<1x384xf32>
    %c0_9 = arith.constant 0 : index
    %c0_10 = arith.constant 0 : index
    %11 = vector.load %arg7[%c0_9, %c0_10] : memref<1x128xf32, #tpu.memory_space<vmem>>, vector<1x128xf32>
    %c0_i32_11 = arith.constant 0 : i32
    %c0_12 = arith.constant 0 : index
    %c0_13 = arith.constant 0 : index
    %12 = vector.load %arg4[%c0_12, %c0_13] : memref<128x384xf32, #tpu.memory_space<vmem>>, vector<128x384xf32>
    %cst_14 = arith.constant dense<0.000000e+00> : vector<1x384xf32>
    %13 = tpu.matmul %11, %12, %cst_14 {dimension_numbers = #tpu.dot_dimension_numbers<[1], [0], [0], [1], [0, 0, 1, 1], [], []>} : vector<1x128xf32>, vector<128x384xf32>, vector<1x384xf32> -> vector<1x384xf32>
    %14 = arith.addf %13, %10 : vector<1x384xf32>
    %15 = arith.index_cast %c0_i32_11 : i32 to index
    %c0_15 = arith.constant 0 : index
    %16 = vector.load %arg8[%15, %c0_15] : memref<8x384xf32, #tpu.memory_space<vmem>>, vector<1x384xf32>
    %17 = vector.extract_strided_slice %16 {offsets = [0, 0], sizes = [1, 128], strides = [1, 1]} : vector<1x384xf32> to vector<1x128xf32>
    %18 = vector.extract_strided_slice %14 {offsets = [0, 0], sizes = [1, 128], strides = [1, 1]} : vector<1x384xf32> to vector<1x128xf32>
    %19 = arith.addf %17, %18 : vector<1x128xf32>
    %20 = arith.negf %19 : vector<1x128xf32>
    %21 = math.exp %20 : vector<1x128xf32>
    %cst_16 = arith.constant 1.000000e+00 : f32
    %22 = vector.broadcast %cst_16 : f32 to vector<1x128xf32>
    %23 = arith.addf %22, %21 : vector<1x128xf32>
    %24 = arith.divf %22, %23 : vector<1x128xf32>
    %25 = vector.extract_strided_slice %16 {offsets = [0, 128], sizes = [1, 128], strides = [1, 1]} : vector<1x384xf32> to vector<1x128xf32>
    %26 = vector.extract_strided_slice %14 {offsets = [0, 128], sizes = [1, 128], strides = [1, 1]} : vector<1x384xf32> to vector<1x128xf32>
    %27 = arith.addf %25, %26 : vector<1x128xf32>
    %28 = arith.negf %27 : vector<1x128xf32>
    %29 = math.exp %28 : vector<1x128xf32>
    %cst_17 = arith.constant 1.000000e+00 : f32
    %30 = vector.broadcast %cst_17 : f32 to vector<1x128xf32>
    %31 = arith.addf %30, %29 : vector<1x128xf32>
    %32 = arith.divf %30, %31 : vector<1x128xf32>
    %33 = vector.extract_strided_slice %16 {offsets = [0, 256], sizes = [1, 128], strides = [1, 1]} : vector<1x384xf32> to vector<1x128xf32>
    %34 = vector.extract_strided_slice %14 {offsets = [0, 256], sizes = [1, 128], strides = [1, 1]} : vector<1x384xf32> to vector<1x128xf32>
    %35 = arith.mulf %24, %34 : vector<1x128xf32>
    %36 = arith.addf %33, %35 : vector<1x128xf32>
    %37 = math.tanh %36 : vector<1x128xf32>
    %cst_18 = arith.constant 1.000000e+00 : f32
    %38 = vector.broadcast %cst_18 : f32 to vector<1x128xf32>
    %39 = arith.subf %38, %32 : vector<1x128xf32>
    %40 = arith.mulf %39, %37 : vector<1x128xf32>
    %41 = arith.mulf %32, %11 : vector<1x128xf32>
    %42 = arith.addf %40, %41 : vector<1x128xf32>
    %43 = arith.index_cast %c0_i32_11 : i32 to index
    %c0_19 = arith.constant 0 : index
    %44 = vector.load %arg6[%43, %c0_19] : memref<8x128xf32, #tpu.memory_space<vmem>>, vector<1x128xf32>
    tpu.vector_store %arg6[%43, %c0_19], %42 {strides = array<i32>} : memref<8x128xf32, #tpu.memory_space<vmem>>, vector<1x128xf32>,
    %c1_i32 = arith.constant 1 : i32
    %c0_20 = arith.constant 0 : index
    %c0_21 = arith.constant 0 : index
    %45 = vector.load %arg4[%c0_20, %c0_21] : memref<128x384xf32, #tpu.memory_space<vmem>>, vector<128x384xf32>
    %cst_22 = arith.constant dense<0.000000e+00> : vector<1x384xf32>
    %46 = tpu.matmul %42, %45, %cst_22 {dimension_numbers = #tpu.dot_dimension_numbers<[1], [0], [0], [1], [0, 0, 1, 1], [], []>} : vector<1x128xf32>, vector<128x384xf32>, vector<1x384xf32> -> vector<1x384xf32>
    %47 = arith.addf %46, %10 : vector<1x384xf32>
    %48 = arith.index_cast %c1_i32 : i32 to index
    %c0_23 = arith.constant 0 : index
    %49 = vector.load %arg8[%48, %c0_23] : memref<8x384xf32, #tpu.memory_space<vmem>>, vector<1x384xf32>
    %50 = vector.extract_strided_slice %49 {offsets = [0, 0], sizes = [1, 128], strides = [1, 1]} : vector<1x384xf32> to vector<1x128xf32>
    %51 = vector.extract_strided_slice %47 {offsets = [0, 0], sizes = [1, 128], strides = [1, 1]} : vector<1x384xf32> to vector<1x128xf32>
    %52 = arith.addf %50, %51 : vector<1x128xf32>
    %53 = arith.negf %52 : vector<1x128xf32>
    %54 = math.exp %53 : vector<1x128xf32>
    %cst_24 = arith.constant 1.000000e+00 : f32
    %55 = vector.broadcast %cst_24 : f32 to vector<1x128xf32>
    %56 = arith.addf %55, %54 : vector<1x128xf32>
    %57 = arith.divf %55, %56 : vector<1x128xf32>
    %58 = vector.extract_strided_slice %49 {offsets = [0, 128], sizes = [1, 128], strides = [1, 1]} : vector<1x384xf32> to vector<1x128xf32>
    %59 = vector.extract_strided_slice %47 {offsets = [0, 128], sizes = [1, 128], strides = [1, 1]} : vector<1x384xf32> to vector<1x128xf32>
    %60 = arith.addf %58, %59 : vector<1x128xf32>
    %61 = arith.negf %60 : vector<1x128xf32>
    %62 = math.exp %61 : vector<1x128xf32>
    %cst_25 = arith.constant 1.000000e+00 : f32
    %63 = vector.broadcast %cst_25 : f32 to vector<1x128xf32>
    %64 = arith.addf %63, %62 : vector<1x128xf32>
    %65 = arith.divf %63, %64 : vector<1x128xf32>
    %66 = vector.extract_strided_slice %49 {offsets = [0, 256], sizes = [1, 128], strides = [1, 1]} : vector<1x384xf32> to vector<1x128xf32>
    %67 = vector.extract_strided_slice %47 {offsets = [0, 256], sizes = [1, 128], strides = [1, 1]} : vector<1x384xf32> to vector<1x128xf32>
    %68 = arith.mulf %57, %67 : vector<1x128xf32>
    %69 = arith.addf %66, %68 : vector<1x128xf32>
    %70 = math.tanh %69 : vector<1x128xf32>
    %cst_26 = arith.constant 1.000000e+00 : f32
    %71 = vector.broadcast %cst_26 : f32 to vector<1x128xf32>
    %72 = arith.subf %71, %65 : vector<1x128xf32>
    %73 = arith.mulf %72, %70 : vector<1x128xf32>
    %74 = arith.mulf %65, %42 : vector<1x128xf32>
    %75 = arith.addf %73, %74 : vector<1x128xf32>
    %76 = arith.index_cast %c1_i32 : i32 to index
    %c0_27 = arith.constant 0 : index
    %77 = vector.load %arg6[%76, %c0_27] : memref<8x128xf32, #tpu.memory_space<vmem>>, vector<1x128xf32>
    tpu.vector_store %arg6[%76, %c0_27], %75 {strides = array<i32>} : memref<8x128xf32, #tpu.memory_space<vmem>>, vector<1x128xf32>,
    %c2_i32 = arith.constant 2 : i32
    %c0_28 = arith.constant 0 : index
    %c0_29 = arith.constant 0 : index
    %78 = vector.load %arg4[%c0_28, %c0_29] : memref<128x384xf32, #tpu.memory_space<vmem>>, vector<128x384xf32>
    %cst_30 = arith.constant dense<0.000000e+00> : vector<1x384xf32>
    %79 = tpu.matmul %75, %78, %cst_30 {dimension_numbers = #tpu.dot_dimension_numbers<[1], [0], [0], [1], [0, 0, 1, 1], [], []>} : vector<1x128xf32>, vector<128x384xf32>, vector<1x384xf32> -> vector<1x384xf32>
    %80 = arith.addf %79, %10 : vector<1x384xf32>
    %81 = arith.index_cast %c2_i32 : i32 to index
    %c0_31 = arith.constant 0 : index
    %82 = vector.load %arg8[%81, %c0_31] : memref<8x384xf32, #tpu.memory_space<vmem>>, vector<1x384xf32>
    %83 = vector.extract_strided_slice %82 {offsets = [0, 0], sizes = [1, 128], strides = [1, 1]} : vector<1x384xf32> to vector<1x128xf32>
    %84 = vector.extract_strided_slice %80 {offsets = [0, 0], sizes = [1, 128], strides = [1, 1]} : vector<1x384xf32> to vector<1x128xf32>
    %85 = arith.addf %83, %84 : vector<1x128xf32>
    %86 = arith.negf %85 : vector<1x128xf32>
    %87 = math.exp %86 : vector<1x128xf32>
    %cst_32 = arith.constant 1.000000e+00 : f32
    %88 = vector.broadcast %cst_32 : f32 to vector<1x128xf32>
    %89 = arith.addf %88, %87 : vector<1x128xf32>
    %90 = arith.divf %88, %89 : vector<1x128xf32>
    %91 = vector.extract_strided_slice %82 {offsets = [0, 128], sizes = [1, 128], strides = [1, 1]} : vector<1x384xf32> to vector<1x128xf32>
    %92 = vector.extract_strided_slice %80 {offsets = [0, 128], sizes = [1, 128], strides = [1, 1]} : vector<1x384xf32> to vector<1x128xf32>
    %93 = arith.addf %91, %92 : vector<1x128xf32>
    %94 = arith.negf %93 : vector<1x128xf32>
    %95 = math.exp %94 : vector<1x128xf32>
    %cst_33 = arith.constant 1.000000e+00 : f32
    %96 = vector.broadcast %cst_33 : f32 to vector<1x128xf32>
    %97 = arith.addf %96, %95 : vector<1x128xf32>
    %98 = arith.divf %96, %97 : vector<1x128xf32>
    %99 = vector.extract_strided_slice %82 {offsets = [0, 256], sizes = [1, 128], strides = [1, 1]} : vector<1x384xf32> to vector<1x128xf32>
    %100 = vector.extract_strided_slice %80 {offsets = [0, 256], sizes = [1, 128], strides = [1, 1]} : vector<1x384xf32> to vector<1x128xf32>
    %101 = arith.mulf %90, %100 : vector<1x128xf32>
    %102 = arith.addf %99, %101 : vector<1x128xf32>
    %103 = math.tanh %102 : vector<1x128xf32>
    %cst_34 = arith.constant 1.000000e+00 : f32
    %104 = vector.broadcast %cst_34 : f32 to vector<1x128xf32>
    %105 = arith.subf %104, %98 : vector<1x128xf32>
    %106 = arith.mulf %105, %103 : vector<1x128xf32>
    %107 = arith.mulf %98, %75 : vector<1x128xf32>
    %108 = arith.addf %106, %107 : vector<1x128xf32>
    %109 = arith.index_cast %c2_i32 : i32 to index
    %c0_35 = arith.constant 0 : index
    %110 = vector.load %arg6[%109, %c0_35] : memref<8x128xf32, #tpu.memory_space<vmem>>, vector<1x128xf32>
    tpu.vector_store %arg6[%109, %c0_35], %108 {strides = array<i32>} : memref<8x128xf32, #tpu.memory_space<vmem>>, vector<1x128xf32>,
    %c3_i32 = arith.constant 3 : i32
    %c0_36 = arith.constant 0 : index
    %c0_37 = arith.constant 0 : index
    %111 = vector.load %arg4[%c0_36, %c0_37] : memref<128x384xf32, #tpu.memory_space<vmem>>, vector<128x384xf32>
    %cst_38 = arith.constant dense<0.000000e+00> : vector<1x384xf32>
    %112 = tpu.matmul %108, %111, %cst_38 {dimension_numbers = #tpu.dot_dimension_numbers<[1], [0], [0], [1], [0, 0, 1, 1], [], []>} : vector<1x128xf32>, vector<128x384xf32>, vector<1x384xf32> -> vector<1x384xf32>
    %113 = arith.addf %112, %10 : vector<1x384xf32>
    %114 = arith.index_cast %c3_i32 : i32 to index
    %c0_39 = arith.constant 0 : index
    %115 = vector.load %arg8[%114, %c0_39] : memref<8x384xf32, #tpu.memory_space<vmem>>, vector<1x384xf32>
    %116 = vector.extract_strided_slice %115 {offsets = [0, 0], sizes = [1, 128], strides = [1, 1]} : vector<1x384xf32> to vector<1x128xf32>
    %117 = vector.extract_strided_slice %113 {offsets = [0, 0], sizes = [1, 128], strides = [1, 1]} : vector<1x384xf32> to vector<1x128xf32>
    %118 = arith.addf %116, %117 : vector<1x128xf32>
    %119 = arith.negf %118 : vector<1x128xf32>
    %120 = math.exp %119 : vector<1x128xf32>
    %cst_40 = arith.constant 1.000000e+00 : f32
    %121 = vector.broadcast %cst_40 : f32 to vector<1x128xf32>
    %122 = arith.addf %121, %120 : vector<1x128xf32>
    %123 = arith.divf %121, %122 : vector<1x128xf32>
    %124 = vector.extract_strided_slice %115 {offsets = [0, 128], sizes = [1, 128], strides = [1, 1]} : vector<1x384xf32> to vector<1x128xf32>
    %125 = vector.extract_strided_slice %113 {offsets = [0, 128], sizes = [1, 128], strides = [1, 1]} : vector<1x384xf32> to vector<1x128xf32>
    %126 = arith.addf %124, %125 : vector<1x128xf32>
    %127 = arith.negf %126 : vector<1x128xf32>
    %128 = math.exp %127 : vector<1x128xf32>
    %cst_41 = arith.constant 1.000000e+00 : f32
    %129 = vector.broadcast %cst_41 : f32 to vector<1x128xf32>
    %130 = arith.addf %129, %128 : vector<1x128xf32>
    %131 = arith.divf %129, %130 : vector<1x128xf32>
    %132 = vector.extract_strided_slice %115 {offsets = [0, 256], sizes = [1, 128], strides = [1, 1]} : vector<1x384xf32> to vector<1x128xf32>
    %133 = vector.extract_strided_slice %113 {offsets = [0, 256], sizes = [1, 128], strides = [1, 1]} : vector<1x384xf32> to vector<1x128xf32>
    %134 = arith.mulf %123, %133 : vector<1x128xf32>
    %135 = arith.addf %132, %134 : vector<1x128xf32>
    %136 = math.tanh %135 : vector<1x128xf32>
    %cst_42 = arith.constant 1.000000e+00 : f32
    %137 = vector.broadcast %cst_42 : f32 to vector<1x128xf32>
    %138 = arith.subf %137, %131 : vector<1x128xf32>
    %139 = arith.mulf %138, %136 : vector<1x128xf32>
    %140 = arith.mulf %131, %108 : vector<1x128xf32>
    %141 = arith.addf %139, %140 : vector<1x128xf32>
    %142 = arith.index_cast %c3_i32 : i32 to index
    %c0_43 = arith.constant 0 : index
    %143 = vector.load %arg6[%142, %c0_43] : memref<8x128xf32, #tpu.memory_space<vmem>>, vector<1x128xf32>
    tpu.vector_store %arg6[%142, %c0_43], %141 {strides = array<i32>} : memref<8x128xf32, #tpu.memory_space<vmem>>, vector<1x128xf32>,
    %c4_i32 = arith.constant 4 : i32
    %c0_44 = arith.constant 0 : index
    %c0_45 = arith.constant 0 : index
    %144 = vector.load %arg4[%c0_44, %c0_45] : memref<128x384xf32, #tpu.memory_space<vmem>>, vector<128x384xf32>
    %cst_46 = arith.constant dense<0.000000e+00> : vector<1x384xf32>
    %145 = tpu.matmul %141, %144, %cst_46 {dimension_numbers = #tpu.dot_dimension_numbers<[1], [0], [0], [1], [0, 0, 1, 1], [], []>} : vector<1x128xf32>, vector<128x384xf32>, vector<1x384xf32> -> vector<1x384xf32>
    %146 = arith.addf %145, %10 : vector<1x384xf32>
    %147 = arith.index_cast %c4_i32 : i32 to index
    %c0_47 = arith.constant 0 : index
    %148 = vector.load %arg8[%147, %c0_47] : memref<8x384xf32, #tpu.memory_space<vmem>>, vector<1x384xf32>
    %149 = vector.extract_strided_slice %148 {offsets = [0, 0], sizes = [1, 128], strides = [1, 1]} : vector<1x384xf32> to vector<1x128xf32>
    %150 = vector.extract_strided_slice %146 {offsets = [0, 0], sizes = [1, 128], strides = [1, 1]} : vector<1x384xf32> to vector<1x128xf32>
    %151 = arith.addf %149, %150 : vector<1x128xf32>
    %152 = arith.negf %151 : vector<1x128xf32>
    %153 = math.exp %152 : vector<1x128xf32>
    %cst_48 = arith.constant 1.000000e+00 : f32
    %154 = vector.broadcast %cst_48 : f32 to vector<1x128xf32>
    %155 = arith.addf %154, %153 : vector<1x128xf32>
    %156 = arith.divf %154, %155 : vector<1x128xf32>
    %157 = vector.extract_strided_slice %148 {offsets = [0, 128], sizes = [1, 128], strides = [1, 1]} : vector<1x384xf32> to vector<1x128xf32>
    %158 = vector.extract_strided_slice %146 {offsets = [0, 128], sizes = [1, 128], strides = [1, 1]} : vector<1x384xf32> to vector<1x128xf32>
    %159 = arith.addf %157, %158 : vector<1x128xf32>
    %160 = arith.negf %159 : vector<1x128xf32>
    %161 = math.exp %160 : vector<1x128xf32>
    %cst_49 = arith.constant 1.000000e+00 : f32
    %162 = vector.broadcast %cst_49 : f32 to vector<1x128xf32>
    %163 = arith.addf %162, %161 : vector<1x128xf32>
    %164 = arith.divf %162, %163 : vector<1x128xf32>
    %165 = vector.extract_strided_slice %148 {offsets = [0, 256], sizes = [1, 128], strides = [1, 1]} : vector<1x384xf32> to vector<1x128xf32>
    %166 = vector.extract_strided_slice %146 {offsets = [0, 256], sizes = [1, 128], strides = [1, 1]} : vector<1x384xf32> to vector<1x128xf32>
    %167 = arith.mulf %156, %166 : vector<1x128xf32>
    %168 = arith.addf %165, %167 : vector<1x128xf32>
    %169 = math.tanh %168 : vector<1x128xf32>
    %cst_50 = arith.constant 1.000000e+00 : f32
    %170 = vector.broadcast %cst_50 : f32 to vector<1x128xf32>
    %171 = arith.subf %170, %164 : vector<1x128xf32>
    %172 = arith.mulf %171, %169 : vector<1x128xf32>
    %173 = arith.mulf %164, %141 : vector<1x128xf32>
    %174 = arith.addf %172, %173 : vector<1x128xf32>
    %175 = arith.index_cast %c4_i32 : i32 to index
    %c0_51 = arith.constant 0 : index
    %176 = vector.load %arg6[%175, %c0_51] : memref<8x128xf32, #tpu.memory_space<vmem>>, vector<1x128xf32>
    tpu.vector_store %arg6[%175, %c0_51], %174 {strides = array<i32>} : memref<8x128xf32, #tpu.memory_space<vmem>>, vector<1x128xf32>,
    %c5_i32 = arith.constant 5 : i32
    %c0_52 = arith.constant 0 : index
    %c0_53 = arith.constant 0 : index
    %177 = vector.load %arg4[%c0_52, %c0_53] : memref<128x384xf32, #tpu.memory_space<vmem>>, vector<128x384xf32>
    %cst_54 = arith.constant dense<0.000000e+00> : vector<1x384xf32>
    %178 = tpu.matmul %174, %177, %cst_54 {dimension_numbers = #tpu.dot_dimension_numbers<[1], [0], [0], [1], [0, 0, 1, 1], [], []>} : vector<1x128xf32>, vector<128x384xf32>, vector<1x384xf32> -> vector<1x384xf32>
    %179 = arith.addf %178, %10 : vector<1x384xf32>
    %180 = arith.index_cast %c5_i32 : i32 to index
    %c0_55 = arith.constant 0 : index
    %181 = vector.load %arg8[%180, %c0_55] : memref<8x384xf32, #tpu.memory_space<vmem>>, vector<1x384xf32>
    %182 = vector.extract_strided_slice %181 {offsets = [0, 0], sizes = [1, 128], strides = [1, 1]} : vector<1x384xf32> to vector<1x128xf32>
    %183 = vector.extract_strided_slice %179 {offsets = [0, 0], sizes = [1, 128], strides = [1, 1]} : vector<1x384xf32> to vector<1x128xf32>
    %184 = arith.addf %182, %183 : vector<1x128xf32>
    %185 = arith.negf %184 : vector<1x128xf32>
    %186 = math.exp %185 : vector<1x128xf32>
    %cst_56 = arith.constant 1.000000e+00 : f32
    %187 = vector.broadcast %cst_56 : f32 to vector<1x128xf32>
    %188 = arith.addf %187, %186 : vector<1x128xf32>
    %189 = arith.divf %187, %188 : vector<1x128xf32>
    %190 = vector.extract_strided_slice %181 {offsets = [0, 128], sizes = [1, 128], strides = [1, 1]} : vector<1x384xf32> to vector<1x128xf32>
    %191 = vector.extract_strided_slice %179 {offsets = [0, 128], sizes = [1, 128], strides = [1, 1]} : vector<1x384xf32> to vector<1x128xf32>
    %192 = arith.addf %190, %191 : vector<1x128xf32>
    %193 = arith.negf %192 : vector<1x128xf32>
    %194 = math.exp %193 : vector<1x128xf32>
    %cst_57 = arith.constant 1.000000e+00 : f32
    %195 = vector.broadcast %cst_57 : f32 to vector<1x128xf32>
    %196 = arith.addf %195, %194 : vector<1x128xf32>
    %197 = arith.divf %195, %196 : vector<1x128xf32>
    %198 = vector.extract_strided_slice %181 {offsets = [0, 256], sizes = [1, 128], strides = [1, 1]} : vector<1x384xf32> to vector<1x128xf32>
    %199 = vector.extract_strided_slice %179 {offsets = [0, 256], sizes = [1, 128], strides = [1, 1]} : vector<1x384xf32> to vector<1x128xf32>
    %200 = arith.mulf %189, %199 : vector<1x128xf32>
    %201 = arith.addf %198, %200 : vector<1x128xf32>
    %202 = math.tanh %201 : vector<1x128xf32>
    %cst_58 = arith.constant 1.000000e+00 : f32
    %203 = vector.broadcast %cst_58 : f32 to vector<1x128xf32>
    %204 = arith.subf %203, %197 : vector<1x128xf32>
    %205 = arith.mulf %204, %202 : vector<1x128xf32>
    %206 = arith.mulf %197, %174 : vector<1x128xf32>
    %207 = arith.addf %205, %206 : vector<1x128xf32>
    %208 = arith.index_cast %c5_i32 : i32 to index
    %c0_59 = arith.constant 0 : index
    %209 = vector.load %arg6[%208, %c0_59] : memref<8x128xf32, #tpu.memory_space<vmem>>, vector<1x128xf32>
    tpu.vector_store %arg6[%208, %c0_59], %207 {strides = array<i32>} : memref<8x128xf32, #tpu.memory_space<vmem>>, vector<1x128xf32>,
    %c6_i32 = arith.constant 6 : i32
    %c0_60 = arith.constant 0 : index
    %c0_61 = arith.constant 0 : index
    %210 = vector.load %arg4[%c0_60, %c0_61] : memref<128x384xf32, #tpu.memory_space<vmem>>, vector<128x384xf32>
    %cst_62 = arith.constant dense<0.000000e+00> : vector<1x384xf32>
    %211 = tpu.matmul %207, %210, %cst_62 {dimension_numbers = #tpu.dot_dimension_numbers<[1], [0], [0], [1], [0, 0, 1, 1], [], []>} : vector<1x128xf32>, vector<128x384xf32>, vector<1x384xf32> -> vector<1x384xf32>
    %212 = arith.addf %211, %10 : vector<1x384xf32>
    %213 = arith.index_cast %c6_i32 : i32 to index
    %c0_63 = arith.constant 0 : index
    %214 = vector.load %arg8[%213, %c0_63] : memref<8x384xf32, #tpu.memory_space<vmem>>, vector<1x384xf32>
    %215 = vector.extract_strided_slice %214 {offsets = [0, 0], sizes = [1, 128], strides = [1, 1]} : vector<1x384xf32> to vector<1x128xf32>
    %216 = vector.extract_strided_slice %212 {offsets = [0, 0], sizes = [1, 128], strides = [1, 1]} : vector<1x384xf32> to vector<1x128xf32>
    %217 = arith.addf %215, %216 : vector<1x128xf32>
    %218 = arith.negf %217 : vector<1x128xf32>
    %219 = math.exp %218 : vector<1x128xf32>
    %cst_64 = arith.constant 1.000000e+00 : f32
    %220 = vector.broadcast %cst_64 : f32 to vector<1x128xf32>
    %221 = arith.addf %220, %219 : vector<1x128xf32>
    %222 = arith.divf %220, %221 : vector<1x128xf32>
    %223 = vector.extract_strided_slice %214 {offsets = [0, 128], sizes = [1, 128], strides = [1, 1]} : vector<1x384xf32> to vector<1x128xf32>
    %224 = vector.extract_strided_slice %212 {offsets = [0, 128], sizes = [1, 128], strides = [1, 1]} : vector<1x384xf32> to vector<1x128xf32>
    %225 = arith.addf %223, %224 : vector<1x128xf32>
    %226 = arith.negf %225 : vector<1x128xf32>
    %227 = math.exp %226 : vector<1x128xf32>
    %cst_65 = arith.constant 1.000000e+00 : f32
    %228 = vector.broadcast %cst_65 : f32 to vector<1x128xf32>
    %229 = arith.addf %228, %227 : vector<1x128xf32>
    %230 = arith.divf %228, %229 : vector<1x128xf32>
    %231 = vector.extract_strided_slice %214 {offsets = [0, 256], sizes = [1, 128], strides = [1, 1]} : vector<1x384xf32> to vector<1x128xf32>
    %232 = vector.extract_strided_slice %212 {offsets = [0, 256], sizes = [1, 128], strides = [1, 1]} : vector<1x384xf32> to vector<1x128xf32>
    %233 = arith.mulf %222, %232 : vector<1x128xf32>
    %234 = arith.addf %231, %233 : vector<1x128xf32>
    %235 = math.tanh %234 : vector<1x128xf32>
    %cst_66 = arith.constant 1.000000e+00 : f32
    %236 = vector.broadcast %cst_66 : f32 to vector<1x128xf32>
    %237 = arith.subf %236, %230 : vector<1x128xf32>
    %238 = arith.mulf %237, %235 : vector<1x128xf32>
    %239 = arith.mulf %230, %207 : vector<1x128xf32>
    %240 = arith.addf %238, %239 : vector<1x128xf32>
    %241 = arith.index_cast %c6_i32 : i32 to index
    %c0_67 = arith.constant 0 : index
    %242 = vector.load %arg6[%241, %c0_67] : memref<8x128xf32, #tpu.memory_space<vmem>>, vector<1x128xf32>
    tpu.vector_store %arg6[%241, %c0_67], %240 {strides = array<i32>} : memref<8x128xf32, #tpu.memory_space<vmem>>, vector<1x128xf32>,
    %c7_i32 = arith.constant 7 : i32
    %c0_68 = arith.constant 0 : index
    %c0_69 = arith.constant 0 : index
    %243 = vector.load %arg4[%c0_68, %c0_69] : memref<128x384xf32, #tpu.memory_space<vmem>>, vector<128x384xf32>
    %cst_70 = arith.constant dense<0.000000e+00> : vector<1x384xf32>
    %244 = tpu.matmul %240, %243, %cst_70 {dimension_numbers = #tpu.dot_dimension_numbers<[1], [0], [0], [1], [0, 0, 1, 1], [], []>} : vector<1x128xf32>, vector<128x384xf32>, vector<1x384xf32> -> vector<1x384xf32>
    %245 = arith.addf %244, %10 : vector<1x384xf32>
    %246 = arith.index_cast %c7_i32 : i32 to index
    %c0_71 = arith.constant 0 : index
    %247 = vector.load %arg8[%246, %c0_71] : memref<8x384xf32, #tpu.memory_space<vmem>>, vector<1x384xf32>
    %248 = vector.extract_strided_slice %247 {offsets = [0, 0], sizes = [1, 128], strides = [1, 1]} : vector<1x384xf32> to vector<1x128xf32>
    %249 = vector.extract_strided_slice %245 {offsets = [0, 0], sizes = [1, 128], strides = [1, 1]} : vector<1x384xf32> to vector<1x128xf32>
    %250 = arith.addf %248, %249 : vector<1x128xf32>
    %251 = arith.negf %250 : vector<1x128xf32>
    %252 = math.exp %251 : vector<1x128xf32>
    %cst_72 = arith.constant 1.000000e+00 : f32
    %253 = vector.broadcast %cst_72 : f32 to vector<1x128xf32>
    %254 = arith.addf %253, %252 : vector<1x128xf32>
    %255 = arith.divf %253, %254 : vector<1x128xf32>
    %256 = vector.extract_strided_slice %247 {offsets = [0, 128], sizes = [1, 128], strides = [1, 1]} : vector<1x384xf32> to vector<1x128xf32>
    %257 = vector.extract_strided_slice %245 {offsets = [0, 128], sizes = [1, 128], strides = [1, 1]} : vector<1x384xf32> to vector<1x128xf32>
    %258 = arith.addf %256, %257 : vector<1x128xf32>
    %259 = arith.negf %258 : vector<1x128xf32>
    %260 = math.exp %259 : vector<1x128xf32>
    %cst_73 = arith.constant 1.000000e+00 : f32
    %261 = vector.broadcast %cst_73 : f32 to vector<1x128xf32>
    %262 = arith.addf %261, %260 : vector<1x128xf32>
    %263 = arith.divf %261, %262 : vector<1x128xf32>
    %264 = vector.extract_strided_slice %247 {offsets = [0, 256], sizes = [1, 128], strides = [1, 1]} : vector<1x384xf32> to vector<1x128xf32>
    %265 = vector.extract_strided_slice %245 {offsets = [0, 256], sizes = [1, 128], strides = [1, 1]} : vector<1x384xf32> to vector<1x128xf32>
    %266 = arith.mulf %255, %265 : vector<1x128xf32>
    %267 = arith.addf %264, %266 : vector<1x128xf32>
    %268 = math.tanh %267 : vector<1x128xf32>
    %cst_74 = arith.constant 1.000000e+00 : f32
    %269 = vector.broadcast %cst_74 : f32 to vector<1x128xf32>
    %270 = arith.subf %269, %263 : vector<1x128xf32>
    %271 = arith.mulf %270, %268 : vector<1x128xf32>
    %272 = arith.mulf %263, %240 : vector<1x128xf32>
    %273 = arith.addf %271, %272 : vector<1x128xf32>
    %274 = arith.index_cast %c7_i32 : i32 to index
    %c0_75 = arith.constant 0 : index
    %275 = vector.load %arg6[%274, %c0_75] : memref<8x128xf32, #tpu.memory_space<vmem>>, vector<1x128xf32>
    tpu.vector_store %arg6[%274, %c0_75], %273 {strides = array<i32>} : memref<8x128xf32, #tpu.memory_space<vmem>>, vector<1x128xf32>,
    %c8_i32 = arith.constant 8 : i32
    %c0_76 = arith.constant 0 : index
    %c0_77 = arith.constant 0 : index
    %276 = vector.load %arg7[%c0_76, %c0_77] : memref<1x128xf32, #tpu.memory_space<vmem>>, vector<1x128xf32>
    tpu.vector_store %arg7[%c0_76, %c0_77], %273 {strides = array<i32>} : memref<1x128xf32, #tpu.memory_space<vmem>>, vector<1x128xf32>,
    return
  }
  func.func @transform_0(%arg0: i32) -> (i32, i32) {
    %c0_i32 = arith.constant 0 : i32
    %c0_i32_0 = arith.constant 0 : i32
    return %arg0, %c0_i32 : i32, i32
  }
  func.func @transform_1(%arg0: i32) -> (i32, i32) {
    %c0_i32 = arith.constant 0 : i32
    %c0_i32_0 = arith.constant 0 : i32
    %c0_i32_1 = arith.constant 0 : i32
    return %c0_i32, %c0_i32_0 : i32, i32
  }
  func.func @transform_2(%arg0: i32) -> (i32, i32) {
    %c0_i32 = arith.constant 0 : i32
    %c0_i32_0 = arith.constant 0 : i32
    %c0_i32_1 = arith.constant 0 : i32
    return %c0_i32, %c0_i32_0 : i32, i32
  }
  func.func @transform_3(%arg0: i32) -> (i32, i32) {
    %c0_i32 = arith.constant 0 : i32
    %c0_i32_0 = arith.constant 0 : i32
    %c0_i32_1 = arith.constant 0 : i32
    return %c0_i32, %c0_i32_0 : i32, i32
  }
  func.func @transform_4(%arg0: i32) -> (i32, i32) {
    %c0_i32 = arith.constant 0 : i32
    %c0_i32_0 = arith.constant 0 : i32
    %c0_i32_1 = arith.constant 0 : i32
    return %c0_i32, %c0_i32_0 : i32, i32
  }
  func.func @transform_5(%arg0: i32) -> (i32, i32) {
    %c0_i32 = arith.constant 0 : i32
    %c0_i32_0 = arith.constant 0 : i32
    return %arg0, %c0_i32 : i32, i32
  }
}

</mosaic_0001>

<llo_original>
// kernel: tpu_custom_call.1
$region0: #{tpu_custom_call.1}
  #allocation0 [shape = 'u32[]', space=smem, size = 0x4, offset = 0x4, fixed_abs, tag = 'smem constant byte address 0x4 - core index']
  #allocation1 [shape = 'u32[144,128]{1,0:T(1,128)}', space=vmem, size = 0x12000, scoped, tag = 'internal scratch']
  #allocation2 [shape = 'f32[1,128]{1,0:T(1,128)}', space=vmem, size = 0x200, scoped, tag = 'scratch operand']
  #allocation3 [shape = 'f32[8,384]{1,0:T(8,128)}', space=vmem, size = 0x3000, scoped, tag = 'scratch operand']
  %s0 = inlined_call_operand.hbm [shape: f32[8,128], index: 0, kind: input, shape index: {}]
  %s1 = inlined_call_operand.vmem [shape: f32[1,128], index: 1, kind: input, shape index: {}]
  %s2 = inlined_call_operand.hbm [shape: f32[128,384], index: 2, kind: input, shape index: {}]
  %s3 = inlined_call_operand.hbm [shape: f32[128,384], index: 3, kind: input, shape index: {}]
  %s4 = inlined_call_operand.vmem [shape: f32[2,384], index: 4, kind: input, shape index: {}]
  %s5 = inlined_call_operand.hbm [shape: f32[8,128], index: 5, kind: output, shape index: {}]
  %s6 = sld [smem:[#allocation0]]
  $region46: #{tpu_custom_call.1} parent=0
    _
  %s8 = ssub.s32 1, %s6
  %s9 = scalar_select 0, %s8, %s6
  $region1: #{tpu_custom_call.1} parent=0
    #allocation4 [shape = 'u8[4096]{0}', space=vmem, size = 0x1000, scoped, tag = 'input window, operand 0, single buffered']
    #allocation5 [shape = 's32[1]{0}', space=sflag, size = 0x4, scoped, tag = 'scoped memory for tpu_custom_call.1']
    #allocation6 [shape = 's32[1]{0}', space=sflag, size = 0x4, scoped, tag = 'scoped memory for tpu_custom_call.1']
    #allocation7 [shape = 'u8[196608]{0}', space=vmem, size = 0x30000, scoped, tag = 'input window, operand 2, single buffered']
    #allocation8 [shape = 's32[1]{0}', space=sflag, size = 0x4, scoped, tag = 'scoped memory for tpu_custom_call.1']
    #allocation9 [shape = 'u8[196608]{0}', space=vmem, size = 0x30000, scoped, tag = 'input window, operand 3, single buffered']
    #allocation10 [shape = 'u8[4096]{0}', space=vmem, size = 0x1000, scoped, tag = 'output window, operand 0, single buffered']
    %10 = vsyncpa [#allocation5], 0
    %11 = vsyncpa [#allocation8], 0
    %12 = vsyncpa [#allocation6], 0
    // Predicated region
    $region2: #{tpu_custom_call.1} parent=1 // pred_check
      _
    $region3: #{tpu_custom_call.1} parent=1 // pred_check_branch
      %14 = sbr.rel (0) target = $region5
    $region4: #{tpu_custom_call.1} parent=1 // pred_region
      %s16 = ssub.s32 128, 128
      %17 = vsyncadd [#allocation5], %s16
      %s19 = sshll.u32 [#allocation4], 4
      %s20 = int_to_ptr.vmem [resolvable:$true] %s19
      %22 = dma.hbm_to_vmem [thread:$0]  %s0, 128, %s20, [#allocation5]
    $region5: #{tpu_custom_call.1} parent=1 // pred_fallthru
      _
    // Predicated region
    $region6: #{tpu_custom_call.1} parent=1 // pred_check
      _
    $region7: #{tpu_custom_call.1} parent=1 // pred_check_branch
      %24 = sbr.rel (0) target = $region9
    $region8: #{tpu_custom_call.1} parent=1 // pred_region
      _
    $region9: #{tpu_custom_call.1} parent=1 // pred_fallthru
      _
    // Predicated region
    $region10: #{tpu_custom_call.1} parent=1 // pred_check
      _
    $region11: #{tpu_custom_call.1} parent=1 // pred_check_branch
      %26 = sbr.rel (0) target = $region13
    $region12: #{tpu_custom_call.1} parent=1 // pred_region
      %s28 = ssub.s32 6144, 6144
      %29 = vsyncadd [#allocation8], %s28
      %s30 = sshll.u32 [#allocation7], 4
      %s31 = int_to_ptr.vmem [resolvable:$true] %s30
      %36 = dma.hbm_to_vmem [thread:$0]  %s2, 6144, %s31, [#allocation8], 384, 384, 24
    $region13: #{tpu_custom_call.1} parent=1 // pred_fallthru
      _
    // Predicated region
    $region14: #{tpu_custom_call.1} parent=1 // pred_check
      _
    $region15: #{tpu_custom_call.1} parent=1 // pred_check_branch
      %38 = sbr.rel (0) target = $region17
    $region16: #{tpu_custom_call.1} parent=1 // pred_region
      %s40 = ssub.s32 6144, 6144
      %41 = vsyncadd [#allocation8], %s40
      %s42 = sshll.u32 [#allocation9], 4
      %s43 = int_to_ptr.vmem [resolvable:$true] %s42
      %48 = dma.hbm_to_vmem [thread:$0]  %s3, 6144, %s43, [#allocation8], 384, 384, 24
    $region17: #{tpu_custom_call.1} parent=1 // pred_fallthru
      _
    // Predicated region
    $region18: #{tpu_custom_call.1} parent=1 // pred_check
      _
    $region19: #{tpu_custom_call.1} parent=1 // pred_check_branch
      %50 = sbr.rel (0) target = $region21
    $region20: #{tpu_custom_call.1} parent=1 // pred_region
      _
    $region21: #{tpu_custom_call.1} parent=1 // pred_fallthru
      _
    // Predicated region
    $region22: #{tpu_custom_call.1} parent=1 // pred_check
      _
    $region23: #{tpu_custom_call.1} parent=1 // pred_check_branch
      %52 = sbr.rel (0) target = $region25
    $region24: #{tpu_custom_call.1} parent=1 // pred_region
      %53 = dma.done [#allocation5], 128
    $region25: #{tpu_custom_call.1} parent=1 // pred_fallthru
      _
    // Predicated region
    $region26: #{tpu_custom_call.1} parent=1 // pred_check
      _
    $region27: #{tpu_custom_call.1} parent=1 // pred_check_branch
      %55 = sbr.rel (0) target = $region29
    $region28: #{tpu_custom_call.1} parent=1 // pred_region
      %56 = dma.done [#allocation8], 6144
    $region29: #{tpu_custom_call.1} parent=1 // pred_fallthru
      _
    // Predicated region
    $region30: #{tpu_custom_call.1} parent=1 // pred_check
      _
    $region31: #{tpu_custom_call.1} parent=1 // pred_check_branch
      %58 = sbr.rel (0) target = $region33
    $region32: #{tpu_custom_call.1} parent=1 // pred_region
      %59 = dma.done [#allocation8], 6144
    $region33: #{tpu_custom_call.1} parent=1 // pred_fallthru
      _
    %p60 = scmp.eq.s32.totalorder 0, 0
    // Predicated region
    $region34: #{tpu_custom_call.1} parent=1 // pred_check
      %p61 = pneg %p60
    $region35: #{tpu_custom_call.1} parent=1 // pred_check_branch
      %63 = sbr.rel (%p61) target = $region37
    $region36: #{tpu_custom_call.1} parent=1 // pred_region
      %v64 = vld [vmem:[%s1] sm:$0x1]
      %65 = vst [vmem:[#allocation2] sm:$0x1] %v64
    $region37: #{tpu_custom_call.1} parent=1 // pred_fallthru
      _
    %v66 = vld [vmem:[#allocation4] sm:$0xff]
    %v67 = vld [vmem:[#allocation7] sm:$0xff]
    %v68 = vld [vmem:[#allocation7 + $0x8] sm:$0xff]
    %v69 = vld [vmem:[#allocation7 + $0x10] sm:$0xff]
    %v70 = vld [vmem:[#allocation7 + $0x18] sm:$0xff]
    %v71 = vld [vmem:[#allocation7 + $0x20] sm:$0xff]
    %v72 = vld [vmem:[#allocation7 + $0x28] sm:$0xff]
    %v73 = vld [vmem:[#allocation7 + $0x30] sm:$0xff]
    %v74 = vld [vmem:[#allocation7 + $0x38] sm:$0xff]
    %v75 = vld [vmem:[#allocation7 + $0x40] sm:$0xff]
    %v76 = vld [vmem:[#allocation7 + $0x48] sm:$0xff]
    %v77 = vld [vmem:[#allocation7 + $0x50] sm:$0xff]
    %v78 = vld [vmem:[#allocation7 + $0x58] sm:$0xff]
    %v79 = vld [vmem:[#allocation7 + $0x60] sm:$0xff]
    %v80 = vld [vmem:[#allocation7 + $0x68] sm:$0xff]
    %v81 = vld [vmem:[#allocation7 + $0x70] sm:$0xff]
    %v82 = vld [vmem:[#allocation7 + $0x78] sm:$0xff]
    %v83 = vld [vmem:[#allocation7 + $0x80] sm:$0xff]
    %v84 = vld [vmem:[#allocation7 + $0x88] sm:$0xff]
    %v85 = vld [vmem:[#allocation7 + $0x90] sm:$0xff]
    %v86 = vld [vmem:[#allocation7 + $0x98] sm:$0xff]
    %v87 = vld [vmem:[#allocation7 + $0xa0] sm:$0xff]
    %v88 = vld [vmem:[#allocation7 + $0xa8] sm:$0xff]
    %v89 = vld [vmem:[#allocation7 + $0xb0] sm:$0xff]
    %v90 = vld [vmem:[#allocation7 + $0xb8] sm:$0xff]
    %v91 = vld [vmem:[#allocation7 + $0xc0] sm:$0xff]
    %v92 = vld [vmem:[#allocation7 + $0xc8] sm:$0xff]
    %v93 = vld [vmem:[#allocation7 + $0xd0] sm:$0xff]
    %v94 = vld [vmem:[#allocation7 + $0xd8] sm:$0xff]
    %v95 = vld [vmem:[#allocation7 + $0xe0] sm:$0xff]
    %v96 = vld [vmem:[#allocation7 + $0xe8] sm:$0xff]
    %v97 = vld [vmem:[#allocation7 + $0xf0] sm:$0xff]
    %v98 = vld [vmem:[#allocation7 + $0xf8] sm:$0xff]
    %v99 = vld [vmem:[#allocation7 + $0x100] sm:$0xff]
    %v100 = vld [vmem:[#allocation7 + $0x108] sm:$0xff]
    %v101 = vld [vmem:[#allocation7 + $0x110] sm:$0xff]
    %v102 = vld [vmem:[#allocation7 + $0x118] sm:$0xff]
    %v103 = vld [vmem:[#allocation7 + $0x120] sm:$0xff]
    %v104 = vld [vmem:[#allocation7 + $0x128] sm:$0xff]
    %v105 = vld [vmem:[#allocation7 + $0x130] sm:$0xff]
    %v106 = vld [vmem:[#allocation7 + $0x138] sm:$0xff]
    %v107 = vld [vmem:[#allocation7 + $0x140] sm:$0xff]
    %v108 = vld [vmem:[#allocation7 + $0x148] sm:$0xff]
    %v109 = vld [vmem:[#allocation7 + $0x150] sm:$0xff]
    %v110 = vld [vmem:[#allocation7 + $0x158] sm:$0xff]
    %v111 = vld [vmem:[#allocation7 + $0x160] sm:$0xff]
    %v112 = vld [vmem:[#allocation7 + $0x168] sm:$0xff]
    %v113 = vld [vmem:[#allocation7 + $0x170] sm:$0xff]
    %v114 = vld [vmem:[#allocation7 + $0x178] sm:$0xff]
    %v115 = vld [vmem:[%s4] ss:$2 sm:$0x7]
    %v117 = vlaneseq
    %v118 = vshrl.u32 %v117, 7
    %v119 = vsub.s32 0, %v118
    %v120 = vrot.slane %v115, %v119
    %v121 = vlaneseq
    %v122 = vshrl.u32 %v121, 7
    %v123 = vsub.s32 1, %v122
    %v124 = vrot.slane %v115, %v123
    %v125 = vlaneseq
    %v126 = vshrl.u32 %v125, 7
    %v127 = vsub.s32 2, %v126
    %v128 = vrot.slane %v115, %v127
    %132 = vmatprep.subr.mxu0 %v68
    %133 = vmatpush1.msra.mxu0 %v67
    %134 = vmatprep.subr.mxu0 %v71
    %135 = vmatpush1.msra.mxu0 %v70
    %136 = vmatprep.subr.mxu0 %v74
    %137 = vmatpush1.msra.mxu0 %v73
    %138 = vmatprep.subr.mxu0 %v77
    %139 = vmatpush1.msra.mxu0 %v76
    %140 = vmatprep.subr.mxu0 %v80
    %141 = vmatpush1.msra.mxu0 %v79
    %142 = vmatprep.subr.mxu0 %v83
    %143 = vmatpush1.msra.mxu0 %v82
    %144 = vmatprep.subr.mxu0 %v86
    %145 = vmatpush1.msra.mxu0 %v85
    %146 = vmatprep.subr.mxu0 %v89
    %147 = vmatpush1.msra.mxu0 %v88
    %148 = vmatprep.subr.mxu0 %v92
    %149 = vmatpush1.msra.mxu0 %v91
    %150 = vmatprep.subr.mxu0 %v95
    %151 = vmatpush1.msra.mxu0 %v94
    %152 = vmatprep.subr.mxu0 %v98
    %153 = vmatpush1.msra.mxu0 %v97
    %154 = vmatprep.subr.mxu0 %v101
    %155 = vmatpush1.msra.mxu0 %v100
    %156 = vmatprep.subr.mxu0 %v104
    %157 = vmatpush1.msra.mxu0 %v103
    %158 = vmatprep.subr.mxu0 %v107
    %159 = vmatpush1.msra.mxu0 %v106
    %160 = vmatprep.subr.mxu0 %v110
    %161 = vmatpush1.msra.mxu0 %v109
    %162 = vmatprep.subr.mxu0 %v113
    %163 = vmatpush1.msra.mxu0 %v112
    %164 = vmatprep.subr.mxu0 0.0
    %165 = vmatpush1.msra.mxu0 0.0
    %166 = vmatprep.subr.mxu0 0.0
    %167 = vmatpush1.msra.mxu0 0.0
    %168 = vmatprep.subr.mxu0 0.0
    %169 = vmatpush1.msra.mxu0 0.0
    %170 = vmatprep.subr.mxu0 0.0
    %171 = vmatpush1.msra.mxu0 0.0
    %172 = vmatprep.subr.mxu0 0.0
    %173 = vmatpush1.msra.mxu0 0.0
    %174 = vmatprep.subr.mxu0 0.0
    %175 = vmatpush1.msra.mxu0 0.0
    %176 = vmatprep.subr.mxu0 0.0
    %177 = vmatpush1.msra.mxu0 0.0
    %178 = vmatprep.subr.mxu0 0.0
    %179 = vmatpush1.msra.mxu0 0.0
    %180 = vmatprep.subr.mxu0 0.0
    %181 = vmatpush1.msra.mxu0 0.0
    %182 = vmatprep.subr.mxu0 0.0
    %183 = vmatpush1.msra.mxu0 0.0
    %184 = vmatprep.subr.mxu0 0.0
    %185 = vmatpush1.msra.mxu0 0.0
    %186 = vmatprep.subr.mxu0 0.0
    %187 = vmatpush1.msra.mxu0 0.0
    %188 = vmatprep.subr.mxu0 0.0
    %189 = vmatpush1.msra.mxu0 0.0
    %190 = vmatprep.subr.mxu0 0.0
    %191 = vmatpush1.msra.mxu0 0.0
    %192 = vmatprep.subr.mxu0 0.0
    %193 = vmatpush1.msra.mxu0 0.0
    %194 = vmatprep.subr.mxu0 0.0
    %195 = vmatpush1.msra.mxu0 0.0
    %196 = vmatprep.mubr.f32.mxu0 0.0
    %197 = vmatmul.mubr.f32.gmra.mrb[0].mxu0 %v66
    %v198 = vpop.f32.mrb[0].mxu0
    %v199 = vadd.f32 %v120, %v198
    %v200 = vpop.f32.mrb[0].mxu0
    %v201 = vadd.f32 %v124, %v200
    %202 = vdwg.mxu0
    %203 = vmatprep.subr.mxu0 0.0
    %204 = vmatpush1.msra.mxu0 %v69
    %205 = vmatprep.subr.mxu0 0.0
    %206 = vmatpush1.msra.mxu0 %v72
    %207 = vmatprep.subr.mxu0 0.0
    %208 = vmatpush1.msra.mxu0 %v75
    %209 = vmatprep.subr.mxu0 0.0
    %210 = vmatpush1.msra.mxu0 %v78
    %211 = vmatprep.subr.mxu0 0.0
    %212 = vmatpush1.msra.mxu0 %v81
    %213 = vmatprep.subr.mxu0 0.0
    %214 = vmatpush1.msra.mxu0 %v84
    %215 = vmatprep.subr.mxu0 0.0
    %216 = vmatpush1.msra.mxu0 %v87
    %217 = vmatprep.subr.mxu0 0.0
    %218 = vmatpush1.msra.mxu0 %v90
    %219 = vmatprep.subr.mxu0 0.0
    %220 = vmatpush1.msra.mxu0 %v93
    %221 = vmatprep.subr.mxu0 0.0
    %222 = vmatpush1.msra.mxu0 %v96
    %223 = vmatprep.subr.mxu0 0.0
    %224 = vmatpush1.msra.mxu0 %v99
    %225 = vmatprep.subr.mxu0 0.0
    %226 = vmatpush1.msra.mxu0 %v102
    %227 = vmatprep.subr.mxu0 0.0
    %228 = vmatpush1.msra.mxu0 %v105
    %229 = vmatprep.subr.mxu0 0.0
    %230 = vmatpush1.msra.mxu0 %v108
    %231 = vmatprep.subr.mxu0 0.0
    %232 = vmatpush1.msra.mxu0 %v111
    %233 = vmatprep.subr.mxu0 0.0
    %234 = vmatpush1.msra.mxu0 %v114
    %235 = vmatprep.subr.mxu0 0.0
    %236 = vmatpush1.msra.mxu0 0.0
    %237 = vmatprep.subr.mxu0 0.0
    %238 = vmatpush1.msra.mxu0 0.0
    %239 = vmatprep.subr.mxu0 0.0
    %240 = vmatpush1.msra.mxu0 0.0
    %241 = vmatprep.subr.mxu0 0.0
    %242 = vmatpush1.msra.mxu0 0.0
    %243 = vmatprep.subr.mxu0 0.0
    %244 = vmatpush1.msra.mxu0 0.0
    %245 = vmatprep.subr.mxu0 0.0
    %246 = vmatpush1.msra.mxu0 0.0
    %247 = vmatprep.subr.mxu0 0.0
    %248 = vmatpush1.msra.mxu0 0.0
    %249 = vmatprep.subr.mxu0 0.0
    %250 = vmatpush1.msra.mxu0 0.0
    %251 = vmatprep.subr.mxu0 0.0
    %252 = vmatpush1.msra.mxu0 0.0
    %253 = vmatprep.subr.mxu0 0.0
    %254 = vmatpush1.msra.mxu0 0.0
    %255 = vmatprep.subr.mxu0 0.0
    %256 = vmatpush1.msra.mxu0 0.0
    %257 = vmatprep.subr.mxu0 0.0
    %258 = vmatpush1.msra.mxu0 0.0
    %259 = vmatprep.subr.mxu0 0.0
    %260 = vmatpush1.msra.mxu0 0.0
    %261 = vmatprep.subr.mxu0 0.0
    %262 = vmatpush1.msra.mxu0 0.0
    %263 = vmatprep.subr.mxu0 0.0
    %264 = vmatpush1.msra.mxu0 0.0
    %265 = vmatprep.subr.mxu0 0.0
    %266 = vmatpush1.msra.mxu0 0.0
    %267 = vmatprep.mubr.f32.mxu0 0.0
    %268 = vmatmul.mubr.f32.gmra.mrb[0].mxu0 %v66
    %v269 = vpop.f32.mrb[0].mxu0
    %v270 = vadd.f32 %v128, %v269
    %v271 = vpop.f32.mrb[0].mxu0
    %272 = vdwg.mxu0
    %273 = vst [vmem:[#allocation3] sm:$0xff] %v199
    %274 = vst [vmem:[#allocation3 + $0x8] sm:$0xff] %v201
    %275 = vst [vmem:[#allocation3 + $0x10] sm:$0xff] %v270
    %s276 = scalar_lea.vmem %s4, 1
    %v277 = vld [vmem:[%s276] ss:$2 sm:$0x7]
    %v278 = vld [vmem:[#allocation2] sm:$0x1]
    %v279 = vld [vmem:[#allocation9] sm:$0xff]
    %v280 = vld [vmem:[#allocation9 + $0x8] sm:$0xff]
    %v281 = vld [vmem:[#allocation9 + $0x10] sm:$0xff]
    %v282 = vld [vmem:[#allocation9 + $0x18] sm:$0xff]
    %v283 = vld [vmem:[#allocation9 + $0x20] sm:$0xff]
    %v284 = vld [vmem:[#allocation9 + $0x28] sm:$0xff]
    %v285 = vld [vmem:[#allocation9 + $0x30] sm:$0xff]
    %v286 = vld [vmem:[#allocation9 + $0x38] sm:$0xff]
    %v287 = vld [vmem:[#allocation9 + $0x40] sm:$0xff]
    %v288 = vld [vmem:[#allocation9 + $0x48] sm:$0xff]
    %v289 = vld [vmem:[#allocation9 + $0x50] sm:$0xff]
    %v290 = vld [vmem:[#allocation9 + $0x58] sm:$0xff]
    %v291 = vld [vmem:[#allocation9 + $0x60] sm:$0xff]
    %v292 = vld [vmem:[#allocation9 + $0x68] sm:$0xff]
    %v293 = vld [vmem:[#allocation9 + $0x70] sm:$0xff]
    %v294 = vld [vmem:[#allocation9 + $0x78] sm:$0xff]
    %v295 = vld [vmem:[#allocation9 + $0x80] sm:$0xff]
    %v296 = vld [vmem:[#allocation9 + $0x88] sm:$0xff]
    %v297 = vld [vmem:[#allocation9 + $0x90] sm:$0xff]
    %v298 = vld [vmem:[#allocation9 + $0x98] sm:$0xff]
    %v299 = vld [vmem:[#allocation9 + $0xa0] sm:$0xff]
    %v300 = vld [vmem:[#allocation9 + $0xa8] sm:$0xff]
    %v301 = vld [vmem:[#allocation9 + $0xb0] sm:$0xff]
    %v302 = vld [vmem:[#allocation9 + $0xb8] sm:$0xff]
    %v303 = vld [vmem:[#allocation9 + $0xc0] sm:$0xff]
    %v304 = vld [vmem:[#allocation9 + $0xc8] sm:$0xff]
    %v305 = vld [vmem:[#allocation9 + $0xd0] sm:$0xff]
    %v306 = vld [vmem:[#allocation9 + $0xd8] sm:$0xff]
    %v307 = vld [vmem:[#allocation9 + $0xe0] sm:$0xff]
    %v308 = vld [vmem:[#allocation9 + $0xe8] sm:$0xff]
    %v309 = vld [vmem:[#allocation9 + $0xf0] sm:$0xff]
    %v310 = vld [vmem:[#allocation9 + $0xf8] sm:$0xff]
    %v311 = vld [vmem:[#allocation9 + $0x100] sm:$0xff]
    %v312 = vld [vmem:[#allocation9 + $0x108] sm:$0xff]
    %v313 = vld [vmem:[#allocation9 + $0x110] sm:$0xff]
    %v314 = vld [vmem:[#allocation9 + $0x118] sm:$0xff]
    %v315 = vld [vmem:[#allocation9 + $0x120] sm:$0xff]
    %v316 = vld [vmem:[#allocation9 + $0x128] sm:$0xff]
    %v317 = vld [vmem:[#allocation9 + $0x130] sm:$0xff]
    %v318 = vld [vmem:[#allocation9 + $0x138] sm:$0xff]
    %v319 = vld [vmem:[#allocation9 + $0x140] sm:$0xff]
    %v320 = vld [vmem:[#allocation9 + $0x148] sm:$0xff]
    %v321 = vld [vmem:[#allocation9 + $0x150] sm:$0xff]
    %v322 = vld [vmem:[#allocation9 + $0x158] sm:$0xff]
    %v323 = vld [vmem:[#allocation9 + $0x160] sm:$0xff]
    %v324 = vld [vmem:[#allocation9 + $0x168] sm:$0xff]
    %v325 = vld [vmem:[#allocation9 + $0x170] sm:$0xff]
    %v326 = vld [vmem:[#allocation9 + $0x178] sm:$0xff]
    %v328 = vlaneseq
    %v329 = vshrl.u32 %v328, 7
    %v330 = vsub.s32 0, %v329
    %v331 = vrot.slane %v277, %v330
    %v332 = vlaneseq
    %v333 = vshrl.u32 %v332, 7
    %v334 = vsub.s32 1, %v333
    %v335 = vrot.slane %v277, %v334
    %v336 = vlaneseq
    %v337 = vshrl.u32 %v336, 7
    %v338 = vsub.s32 2, %v337
    %v339 = vrot.slane %v277, %v338
    %343 = vmatprep.subr.mxu0 %v280
    %344 = vmatpush1.msra.mxu0 %v279
    %345 = vmatprep.subr.mxu0 %v283
    %346 = vmatpush1.msra.mxu0 %v282
    %347 = vmatprep.subr.mxu0 %v286
    %348 = vmatpush1.msra.mxu0 %v285
    %349 = vmatprep.subr.mxu0 %v289
    %350 = vmatpush1.msra.mxu0 %v288
    %351 = vmatprep.subr.mxu0 %v292
    %352 = vmatpush1.msra.mxu0 %v291
    %353 = vmatprep.subr.mxu0 %v295
    %354 = vmatpush1.msra.mxu0 %v294
    %355 = vmatprep.subr.mxu0 %v298
    %356 = vmatpush1.msra.mxu0 %v297
    %357 = vmatprep.subr.mxu0 %v301
    %358 = vmatpush1.msra.mxu0 %v300
    %359 = vmatprep.subr.mxu0 %v304
    %360 = vmatpush1.msra.mxu0 %v303
    %361 = vmatprep.subr.mxu0 %v307
    %362 = vmatpush1.msra.mxu0 %v306
    %363 = vmatprep.subr.mxu0 %v310
    %364 = vmatpush1.msra.mxu0 %v309
    %365 = vmatprep.subr.mxu0 %v313
    %366 = vmatpush1.msra.mxu0 %v312
    %367 = vmatprep.subr.mxu0 %v316
    %368 = vmatpush1.msra.mxu0 %v315
    %369 = vmatprep.subr.mxu0 %v319
    %370 = vmatpush1.msra.mxu0 %v318
    %371 = vmatprep.subr.mxu0 %v322
    %372 = vmatpush1.msra.mxu0 %v321
    %373 = vmatprep.subr.mxu0 %v325
    %374 = vmatpush1.msra.mxu0 %v324
    %375 = vmatprep.subr.mxu0 0.0
    %376 = vmatpush1.msra.mxu0 0.0
    %377 = vmatprep.subr.mxu0 0.0
    %378 = vmatpush1.msra.mxu0 0.0
    %379 = vmatprep.subr.mxu0 0.0
    %380 = vmatpush1.msra.mxu0 0.0
    %381 = vmatprep.subr.mxu0 0.0
    %382 = vmatpush1.msra.mxu0 0.0
    %383 = vmatprep.subr.mxu0 0.0
    %384 = vmatpush1.msra.mxu0 0.0
    %385 = vmatprep.subr.mxu0 0.0
    %386 = vmatpush1.msra.mxu0 0.0
    %387 = vmatprep.subr.mxu0 0.0
    %388 = vmatpush1.msra.mxu0 0.0
    %389 = vmatprep.subr.mxu0 0.0
    %390 = vmatpush1.msra.mxu0 0.0
    %391 = vmatprep.subr.mxu0 0.0
    %392 = vmatpush1.msra.mxu0 0.0
    %393 = vmatprep.subr.mxu0 0.0
    %394 = vmatpush1.msra.mxu0 0.0
    %395 = vmatprep.subr.mxu0 0.0
    %396 = vmatpush1.msra.mxu0 0.0
    %397 = vmatprep.subr.mxu0 0.0
    %398 = vmatpush1.msra.mxu0 0.0
    %399 = vmatprep.subr.mxu0 0.0
    %400 = vmatpush1.msra.mxu0 0.0
    %401 = vmatprep.subr.mxu0 0.0
    %402 = vmatpush1.msra.mxu0 0.0
    %403 = vmatprep.subr.mxu0 0.0
    %404 = vmatpush1.msra.mxu0 0.0
    %405 = vmatprep.subr.mxu0 0.0
    %406 = vmatpush1.msra.mxu0 0.0
    %407 = vmatprep.mubr.f32.mxu0 0.0
    %408 = vmatmul.mubr.f32.gmra.mrb[0].mxu0 %v278
    %v409 = vpop.f32.mrb[0].mxu0
    %v410 = vadd.f32 %v331, %v409
    %v411 = vpop.f32.mrb[0].mxu0
    %v412 = vadd.f32 %v335, %v411
    %413 = vdwg.mxu0
    %414 = vmatprep.subr.mxu0 0.0
    %415 = vmatpush1.msra.mxu0 %v281
    %416 = vmatprep.subr.mxu0 0.0
    %417 = vmatpush1.msra.mxu0 %v284
    %418 = vmatprep.subr.mxu0 0.0
    %419 = vmatpush1.msra.mxu0 %v287
    %420 = vmatprep.subr.mxu0 0.0
    %421 = vmatpush1.msra.mxu0 %v290
    %422 = vmatprep.subr.mxu0 0.0
    %423 = vmatpush1.msra.mxu0 %v293
    %424 = vmatprep.subr.mxu0 0.0
    %425 = vmatpush1.msra.mxu0 %v296
    %426 = vmatprep.subr.mxu0 0.0
    %427 = vmatpush1.msra.mxu0 %v299
    %428 = vmatprep.subr.mxu0 0.0
    %429 = vmatpush1.msra.mxu0 %v302
    %430 = vmatprep.subr.mxu0 0.0
    %431 = vmatpush1.msra.mxu0 %v305
    %432 = vmatprep.subr.mxu0 0.0
    %433 = vmatpush1.msra.mxu0 %v308
    %434 = vmatprep.subr.mxu0 0.0
    %435 = vmatpush1.msra.mxu0 %v311
    %436 = vmatprep.subr.mxu0 0.0
    %437 = vmatpush1.msra.mxu0 %v314
    %438 = vmatprep.subr.mxu0 0.0
    %439 = vmatpush1.msra.mxu0 %v317
    %440 = vmatprep.subr.mxu0 0.0
    %441 = vmatpush1.msra.mxu0 %v320
    %442 = vmatprep.subr.mxu0 0.0
    %443 = vmatpush1.msra.mxu0 %v323
    %444 = vmatprep.subr.mxu0 0.0
    %445 = vmatpush1.msra.mxu0 %v326
    %446 = vmatprep.subr.mxu0 0.0
    %447 = vmatpush1.msra.mxu0 0.0
    %448 = vmatprep.subr.mxu0 0.0
    %449 = vmatpush1.msra.mxu0 0.0
    %450 = vmatprep.subr.mxu0 0.0
    %451 = vmatpush1.msra.mxu0 0.0
    %452 = vmatprep.subr.mxu0 0.0
    %453 = vmatpush1.msra.mxu0 0.0
    %454 = vmatprep.subr.mxu0 0.0
    %455 = vmatpush1.msra.mxu0 0.0
    %456 = vmatprep.subr.mxu0 0.0
    %457 = vmatpush1.msra.mxu0 0.0
    %458 = vmatprep.subr.mxu0 0.0
    %459 = vmatpush1.msra.mxu0 0.0
    %460 = vmatprep.subr.mxu0 0.0
    %461 = vmatpush1.msra.mxu0 0.0
    %462 = vmatprep.subr.mxu0 0.0
    %463 = vmatpush1.msra.mxu0 0.0
    %464 = vmatprep.subr.mxu0 0.0
    %465 = vmatpush1.msra.mxu0 0.0
    %466 = vmatprep.subr.mxu0 0.0
    %467 = vmatpush1.msra.mxu0 0.0
    %468 = vmatprep.subr.mxu0 0.0
    %469 = vmatpush1.msra.mxu0 0.0
    %470 = vmatprep.subr.mxu0 0.0
    %471 = vmatpush1.msra.mxu0 0.0
    %472 = vmatprep.subr.mxu0 0.0
    %473 = vmatpush1.msra.mxu0 0.0
    %474 = vmatprep.subr.mxu0 0.0
    %475 = vmatpush1.msra.mxu0 0.0
    %476 = vmatprep.subr.mxu0 0.0
    %477 = vmatpush1.msra.mxu0 0.0
    %478 = vmatprep.mubr.f32.mxu0 0.0
    %479 = vmatmul.mubr.f32.gmra.mrb[0].mxu0 %v278
    %v480 = vpop.f32.mrb[0].mxu0
    %v481 = vadd.f32 %v339, %v480
    %v482 = vpop.f32.mrb[0].mxu0
    %483 = vdwg.mxu0
    %v484 = vld [vmem:[#allocation3] ss:$8 sm:$0x7]
    %v485 = vadd.f32 %v484, %v410
    %v486 = vxor.u32 %v485, 2147483648
    %v487 = vmul.f32 %v486, 1.442695
    %v488 = vpow.pop %v487
    %v489 = vadd.f32 %v488, 1.0
    %v490 = vrcp.pop %v489
    %v491 = vmul.f32 1.0, %v490
    %v493 = vrot.slane %v484, 1
    %v495 = vadd.f32 %v493, %v412
    %v496 = vxor.u32 %v495, 2147483648
    %v497 = vmul.f32 %v496, 1.442695
    %v498 = vpow.pop %v497
    %v499 = vadd.f32 %v498, 1.0
    %v500 = vrcp.pop %v499
    %v501 = vmul.f32 1.0, %v500
    %v502 = vmul.f32 %v491, %v481
    %v503 = vrot.slane %v484, 2
    %v505 = vadd.f32 %v503, %v502
    %v506 = vtanh.pop %v505
    %v507 = vsub.f32 1.0, %v501
    %v508 = vmul.f32 %v507, %v506
    %v509 = vmul.f32 %v501, %v278
    %v510 = vadd.f32 %v508, %v509
    %511 = vst [vmem:[#allocation10] sm:$0x1] %v510
    %v512 = vld [vmem:[#allocation9] sm:$0xff]
    %v513 = vld [vmem:[#allocation9 + $0x8] sm:$0xff]
    %v514 = vld [vmem:[#allocation9 + $0x10] sm:$0xff]
    %v515 = vld [vmem:[#allocation9 + $0x18] sm:$0xff]
    %v516 = vld [vmem:[#allocation9 + $0x20] sm:$0xff]
    %v517 = vld [vmem:[#allocation9 + $0x28] sm:$0xff]
    %v518 = vld [vmem:[#allocation9 + $0x30] sm:$0xff]
    %v519 = vld [vmem:[#allocation9 + $0x38] sm:$0xff]
    %v520 = vld [vmem:[#allocation9 + $0x40] sm:$0xff]
    %v521 = vld [vmem:[#allocation9 + $0x48] sm:$0xff]
    %v522 = vld [vmem:[#allocation9 + $0x50] sm:$0xff]
    %v523 = vld [vmem:[#allocation9 + $0x58] sm:$0xff]
    %v524 = vld [vmem:[#allocation9 + $0x60] sm:$0xff]
    %v525 = vld [vmem:[#allocation9 + $0x68] sm:$0xff]
    %v526 = vld [vmem:[#allocation9 + $0x70] sm:$0xff]
    %v527 = vld [vmem:[#allocation9 + $0x78] sm:$0xff]
    %v528 = vld [vmem:[#allocation9 + $0x80] sm:$0xff]
    %v529 = vld [vmem:[#allocation9 + $0x88] sm:$0xff]
    %v530 = vld [vmem:[#allocation9 + $0x90] sm:$0xff]
    %v531 = vld [vmem:[#allocation9 + $0x98] sm:$0xff]
    %v532 = vld [vmem:[#allocation9 + $0xa0] sm:$0xff]
    %v533 = vld [vmem:[#allocation9 + $0xa8] sm:$0xff]
    %v534 = vld [vmem:[#allocation9 + $0xb0] sm:$0xff]
    %v535 = vld [vmem:[#allocation9 + $0xb8] sm:$0xff]
    %v536 = vld [vmem:[#allocation9 + $0xc0] sm:$0xff]
    %v537 = vld [vmem:[#allocation9 + $0xc8] sm:$0xff]
    %v538 = vld [vmem:[#allocation9 + $0xd0] sm:$0xff]
    %v539 = vld [vmem:[#allocation9 + $0xd8] sm:$0xff]
    %v540 = vld [vmem:[#allocation9 + $0xe0] sm:$0xff]
    %v541 = vld [vmem:[#allocation9 + $0xe8] sm:$0xff]
    %v542 = vld [vmem:[#allocation9 + $0xf0] sm:$0xff]
    %v543 = vld [vmem:[#allocation9 + $0xf8] sm:$0xff]
    %v544 = vld [vmem:[#allocation9 + $0x100] sm:$0xff]
    %v545 = vld [vmem:[#allocation9 + $0x108] sm:$0xff]
    %v546 = vld [vmem:[#allocation9 + $0x110] sm:$0xff]
    %v547 = vld [vmem:[#allocation9 + $0x118] sm:$0xff]
    %v548 = vld [vmem:[#allocation9 + $0x120] sm:$0xff]
    %v549 = vld [vmem:[#allocation9 + $0x128] sm:$0xff]
    %v550 = vld [vmem:[#allocation9 + $0x130] sm:$0xff]
    %v551 = vld [vmem:[#allocation9 + $0x138] sm:$0xff]
    %v552 = vld [vmem:[#allocation9 + $0x140] sm:$0xff]
    %v553 = vld [vmem:[#allocation9 + $0x148] sm:$0xff]
    %v554 = vld [vmem:[#allocation9 + $0x150] sm:$0xff]
    %v555 = vld [vmem:[#allocation9 + $0x158] sm:$0xff]
    %v556 = vld [vmem:[#allocation9 + $0x160] sm:$0xff]
    %v557 = vld [vmem:[#allocation9 + $0x168] sm:$0xff]
    %v558 = vld [vmem:[#allocation9 + $0x170] sm:$0xff]
    %v559 = vld [vmem:[#allocation9 + $0x178] sm:$0xff]
    %560 = vmatprep.subr.mxu0 %v513
    %561 = vmatpush1.msra.mxu0 %v512
    %562 = vmatprep.subr.mxu0 %v516
    %563 = vmatpush1.msra.mxu0 %v515
    %564 = vmatprep.subr.mxu0 %v519
    %565 = vmatpush1.msra.mxu0 %v518
    %566 = vmatprep.subr.mxu0 %v522
    %567 = vmatpush1.msra.mxu0 %v521
    %568 = vmatprep.subr.mxu0 %v525
    %569 = vmatpush1.msra.mxu0 %v524
    %570 = vmatprep.subr.mxu0 %v528
    %571 = vmatpush1.msra.mxu0 %v527
    %572 = vmatprep.subr.mxu0 %v531
    %573 = vmatpush1.msra.mxu0 %v530
    %574 = vmatprep.subr.mxu0 %v534
    %575 = vmatpush1.msra.mxu0 %v533
    %576 = vmatprep.subr.mxu0 %v537
    %577 = vmatpush1.msra.mxu0 %v536
    %578 = vmatprep.subr.mxu0 %v540
    %579 = vmatpush1.msra.mxu0 %v539
    %580 = vmatprep.subr.mxu0 %v543
    %581 = vmatpush1.msra.mxu0 %v542
    %582 = vmatprep.subr.mxu0 %v546
    %583 = vmatpush1.msra.mxu0 %v545
    %584 = vmatprep.subr.mxu0 %v549
    %585 = vmatpush1.msra.mxu0 %v548
    %586 = vmatprep.subr.mxu0 %v552
    %587 = vmatpush1.msra.mxu0 %v551
    %588 = vmatprep.subr.mxu0 %v555
    %589 = vmatpush1.msra.mxu0 %v554
    %590 = vmatprep.subr.mxu0 %v558
    %591 = vmatpush1.msra.mxu0 %v557
    %592 = vmatprep.subr.mxu0 0.0
    %593 = vmatpush1.msra.mxu0 0.0
    %594 = vmatprep.subr.mxu0 0.0
    %595 = vmatpush1.msra.mxu0 0.0
    %596 = vmatprep.subr.mxu0 0.0
    %597 = vmatpush1.msra.mxu0 0.0
    %598 = vmatprep.subr.mxu0 0.0
    %599 = vmatpush1.msra.mxu0 0.0
    %600 = vmatprep.subr.mxu0 0.0
    %601 = vmatpush1.msra.mxu0 0.0
    %602 = vmatprep.subr.mxu0 0.0
    %603 = vmatpush1.msra.mxu0 0.0
    %604 = vmatprep.subr.mxu0 0.0
    %605 = vmatpush1.msra.mxu0 0.0
    %606 = vmatprep.subr.mxu0 0.0
    %607 = vmatpush1.msra.mxu0 0.0
    %608 = vmatprep.subr.mxu0 0.0
    %609 = vmatpush1.msra.mxu0 0.0
    %610 = vmatprep.subr.mxu0 0.0
    %611 = vmatpush1.msra.mxu0 0.0
    %612 = vmatprep.subr.mxu0 0.0
    %613 = vmatpush1.msra.mxu0 0.0
    %614 = vmatprep.subr.mxu0 0.0
    %615 = vmatpush1.msra.mxu0 0.0
    %616 = vmatprep.subr.mxu0 0.0
    %617 = vmatpush1.msra.mxu0 0.0
    %618 = vmatprep.subr.mxu0 0.0
    %619 = vmatpush1.msra.mxu0 0.0
    %620 = vmatprep.subr.mxu0 0.0
    %621 = vmatpush1.msra.mxu0 0.0
    %622 = vmatprep.subr.mxu0 0.0
    %623 = vmatpush1.msra.mxu0 0.0
    %624 = vmatprep.mubr.f32.mxu0 0.0
    %625 = vmatmul.mubr.f32.gmra.mrb[0].mxu0 %v510
    %v626 = vpop.f32.mrb[0].mxu0
    %v627 = vadd.f32 %v331, %v626
    %v628 = vpop.f32.mrb[0].mxu0
    %v629 = vadd.f32 %v335, %v628
    %630 = vdwg.mxu0
    %631 = vmatprep.subr.mxu0 0.0
    %632 = vmatpush1.msra.mxu0 %v514
    %633 = vmatprep.subr.mxu0 0.0
    %634 = vmatpush1.msra.mxu0 %v517
    %635 = vmatprep.subr.mxu0 0.0
    %636 = vmatpush1.msra.mxu0 %v520
    %637 = vmatprep.subr.mxu0 0.0
    %638 = vmatpush1.msra.mxu0 %v523
    %639 = vmatprep.subr.mxu0 0.0
    %640 = vmatpush1.msra.mxu0 %v526
    %641 = vmatprep.subr.mxu0 0.0
    %642 = vmatpush1.msra.mxu0 %v529
    %643 = vmatprep.subr.mxu0 0.0
    %644 = vmatpush1.msra.mxu0 %v532
    %645 = vmatprep.subr.mxu0 0.0
    %646 = vmatpush1.msra.mxu0 %v535
    %647 = vmatprep.subr.mxu0 0.0
    %648 = vmatpush1.msra.mxu0 %v538
    %649 = vmatprep.subr.mxu0 0.0
    %650 = vmatpush1.msra.mxu0 %v541
    %651 = vmatprep.subr.mxu0 0.0
    %652 = vmatpush1.msra.mxu0 %v544
    %653 = vmatprep.subr.mxu0 0.0
    %654 = vmatpush1.msra.mxu0 %v547
    %655 = vmatprep.subr.mxu0 0.0
    %656 = vmatpush1.msra.mxu0 %v550
    %657 = vmatprep.subr.mxu0 0.0
    %658 = vmatpush1.msra.mxu0 %v553
    %659 = vmatprep.subr.mxu0 0.0
    %660 = vmatpush1.msra.mxu0 %v556
    %661 = vmatprep.subr.mxu0 0.0
    %662 = vmatpush1.msra.mxu0 %v559
    %663 = vmatprep.subr.mxu0 0.0
    %664 = vmatpush1.msra.mxu0 0.0
    %665 = vmatprep.subr.mxu0 0.0
    %666 = vmatpush1.msra.mxu0 0.0
    %667 = vmatprep.subr.mxu0 0.0
    %668 = vmatpush1.msra.mxu0 0.0
    %669 = vmatprep.subr.mxu0 0.0
    %670 = vmatpush1.msra.mxu0 0.0
    %671 = vmatprep.subr.mxu0 0.0
    %672 = vmatpush1.msra.mxu0 0.0
    %673 = vmatprep.subr.mxu0 0.0
    %674 = vmatpush1.msra.mxu0 0.0
    %675 = vmatprep.subr.mxu0 0.0
    %676 = vmatpush1.msra.mxu0 0.0
    %677 = vmatprep.subr.mxu0 0.0
    %678 = vmatpush1.msra.mxu0 0.0
    %679 = vmatprep.subr.mxu0 0.0
    %680 = vmatpush1.msra.mxu0 0.0
    %681 = vmatprep.subr.mxu0 0.0
    %682 = vmatpush1.msra.mxu0 0.0
    %683 = vmatprep.subr.mxu0 0.0
    %684 = vmatpush1.msra.mxu0 0.0
    %685 = vmatprep.subr.mxu0 0.0
    %686 = vmatpush1.msra.mxu0 0.0
    %687 = vmatprep.subr.mxu0 0.0
    %688 = vmatpush1.msra.mxu0 0.0
    %689 = vmatprep.subr.mxu0 0.0
    %690 = vmatpush1.msra.mxu0 0.0
    %691 = vmatprep.subr.mxu0 0.0
    %692 = vmatpush1.msra.mxu0 0.0
    %693 = vmatprep.subr.mxu0 0.0
    %694 = vmatpush1.msra.mxu0 0.0
    %695 = vmatprep.mubr.f32.mxu0 0.0
    %696 = vmatmul.mubr.f32.gmra.mrb[0].mxu0 %v510
    %v697 = vpop.f32.mrb[0].mxu0
    %v698 = vadd.f32 %v339, %v697
    %v699 = vpop.f32.mrb[0].mxu0
    %700 = vdwg.mxu0
    %s701 = scalar_lea.vmem [#allocation3], 1
    %v702 = vld [vmem:[%s701] ss:$8 sm:$0x7]
    %v703 = vadd.f32 %v702, %v627
    %v704 = vxor.u32 %v703, 2147483648
    %v705 = vmul.f32 %v704, 1.442695
    %v706 = vpow.pop %v705
    %v707 = vadd.f32 %v706, 1.0
    %v708 = vrcp.pop %v707
    %v709 = vmul.f32 1.0, %v708
    %v711 = vrot.slane %v702, 1
    %v713 = vadd.f32 %v711, %v629
    %v714 = vxor.u32 %v713, 2147483648
    %v715 = vmul.f32 %v714, 1.442695
    %v716 = vpow.pop %v715
    %v717 = vadd.f32 %v716, 1.0
    %v718 = vrcp.pop %v717
    %v719 = vmul.f32 1.0, %v718
    %v720 = vmul.f32 %v709, %v698
    %v721 = vrot.slane %v702, 2
    %v723 = vadd.f32 %v721, %v720
    %v724 = vtanh.pop %v723
    %v725 = vsub.f32 1.0, %v719
    %v726 = vmul.f32 %v725, %v724
    %v727 = vmul.f32 %v719, %v510
    %v728 = vadd.f32 %v726, %v727
    %729 = vst [vmem:[#allocation10 + $0x1] sm:$0x1] %v728
    %v730 = vld [vmem:[#allocation9] sm:$0xff]
    %v731 = vld [vmem:[#allocation9 + $0x8] sm:$0xff]
    %v732 = vld [vmem:[#allocation9 + $0x10] sm:$0xff]
    %v733 = vld [vmem:[#allocation9 + $0x18] sm:$0xff]
    %v734 = vld [vmem:[#allocation9 + $0x20] sm:$0xff]
    %v735 = vld [vmem:[#allocation9 + $0x28] sm:$0xff]
    %v736 = vld [vmem:[#allocation9 + $0x30] sm:$0xff]
    %v737 = vld [vmem:[#allocation9 + $0x38] sm:$0xff]
    %v738 = vld [vmem:[#allocation9 + $0x40] sm:$0xff]
    %v739 = vld [vmem:[#allocation9 + $0x48] sm:$0xff]
    %v740 = vld [vmem:[#allocation9 + $0x50] sm:$0xff]
    %v741 = vld [vmem:[#allocation9 + $0x58] sm:$0xff]
    %v742 = vld [vmem:[#allocation9 + $0x60] sm:$0xff]
    %v743 = vld [vmem:[#allocation9 + $0x68] sm:$0xff]
    %v744 = vld [vmem:[#allocation9 + $0x70] sm:$0xff]
    %v745 = vld [vmem:[#allocation9 + $0x78] sm:$0xff]
    %v746 = vld [vmem:[#allocation9 + $0x80] sm:$0xff]
    %v747 = vld [vmem:[#allocation9 + $0x88] sm:$0xff]
    %v748 = vld [vmem:[#allocation9 + $0x90] sm:$0xff]
    %v749 = vld [vmem:[#allocation9 + $0x98] sm:$0xff]
    %v750 = vld [vmem:[#allocation9 + $0xa0] sm:$0xff]
    %v751 = vld [vmem:[#allocation9 + $0xa8] sm:$0xff]
    %v752 = vld [vmem:[#allocation9 + $0xb0] sm:$0xff]
    %v753 = vld [vmem:[#allocation9 + $0xb8] sm:$0xff]
    %v754 = vld [vmem:[#allocation9 + $0xc0] sm:$0xff]
    %v755 = vld [vmem:[#allocation9 + $0xc8] sm:$0xff]
    %v756 = vld [vmem:[#allocation9 + $0xd0] sm:$0xff]
    %v757 = vld [vmem:[#allocation9 + $0xd8] sm:$0xff]
    %v758 = vld [vmem:[#allocation9 + $0xe0] sm:$0xff]
    %v759 = vld [vmem:[#allocation9 + $0xe8] sm:$0xff]
    %v760 = vld [vmem:[#allocation9 + $0xf0] sm:$0xff]
    %v761 = vld [vmem:[#allocation9 + $0xf8] sm:$0xff]
    %v762 = vld [vmem:[#allocation9 + $0x100] sm:$0xff]
    %v763 = vld [vmem:[#allocation9 + $0x108] sm:$0xff]
    %v764 = vld [vmem:[#allocation9 + $0x110] sm:$0xff]
    %v765 = vld [vmem:[#allocation9 + $0x118] sm:$0xff]
    %v766 = vld [vmem:[#allocation9 + $0x120] sm:$0xff]
    %v767 = vld [vmem:[#allocation9 + $0x128] sm:$0xff]
    %v768 = vld [vmem:[#allocation9 + $0x130] sm:$0xff]
    %v769 = vld [vmem:[#allocation9 + $0x138] sm:$0xff]
    %v770 = vld [vmem:[#allocation9 + $0x140] sm:$0xff]
    %v771 = vld [vmem:[#allocation9 + $0x148] sm:$0xff]
    %v772 = vld [vmem:[#allocation9 + $0x150] sm:$0xff]
    %v773 = vld [vmem:[#allocation9 + $0x158] sm:$0xff]
    %v774 = vld [vmem:[#allocation9 + $0x160] sm:$0xff]
    %v775 = vld [vmem:[#allocation9 + $0x168] sm:$0xff]
    %v776 = vld [vmem:[#allocation9 + $0x170] sm:$0xff]
    %v777 = vld [vmem:[#allocation9 + $0x178] sm:$0xff]
    %778 = vmatprep.subr.mxu0 %v731
    %779 = vmatpush1.msra.mxu0 %v730
    %780 = vmatprep.subr.mxu0 %v734
    %781 = vmatpush1.msra.mxu0 %v733
    %782 = vmatprep.subr.mxu0 %v737
    %783 = vmatpush1.msra.mxu0 %v736
    %784 = vmatprep.subr.mxu0 %v740
    %785 = vmatpush1.msra.mxu0 %v739
    %786 = vmatprep.subr.mxu0 %v743
    %787 = vmatpush1.msra.mxu0 %v742
    %788 = vmatprep.subr.mxu0 %v746
    %789 = vmatpush1.msra.mxu0 %v745
    %790 = vmatprep.subr.mxu0 %v749
    %791 = vmatpush1.msra.mxu0 %v748
    %792 = vmatprep.subr.mxu0 %v752
    %793 = vmatpush1.msra.mxu0 %v751
    %794 = vmatprep.subr.mxu0 %v755
    %795 = vmatpush1.msra.mxu0 %v754
    %796 = vmatprep.subr.mxu0 %v758
    %797 = vmatpush1.msra.mxu0 %v757
    %798 = vmatprep.subr.mxu0 %v761
    %799 = vmatpush1.msra.mxu0 %v760
    %800 = vmatprep.subr.mxu0 %v764
    %801 = vmatpush1.msra.mxu0 %v763
    %802 = vmatprep.subr.mxu0 %v767
    %803 = vmatpush1.msra.mxu0 %v766
    %804 = vmatprep.subr.mxu0 %v770
    %805 = vmatpush1.msra.mxu0 %v769
    %806 = vmatprep.subr.mxu0 %v773
    %807 = vmatpush1.msra.mxu0 %v772
    %808 = vmatprep.subr.mxu0 %v776
    %809 = vmatpush1.msra.mxu0 %v775
    %810 = vmatprep.subr.mxu0 0.0
    %811 = vmatpush1.msra.mxu0 0.0
    %812 = vmatprep.subr.mxu0 0.0
    %813 = vmatpush1.msra.mxu0 0.0
    %814 = vmatprep.subr.mxu0 0.0
    %815 = vmatpush1.msra.mxu0 0.0
    %816 = vmatprep.subr.mxu0 0.0
    %817 = vmatpush1.msra.mxu0 0.0
    %818 = vmatprep.subr.mxu0 0.0
    %819 = vmatpush1.msra.mxu0 0.0
    %820 = vmatprep.subr.mxu0 0.0
    %821 = vmatpush1.msra.mxu0 0.0
    %822 = vmatprep.subr.mxu0 0.0
    %823 = vmatpush1.msra.mxu0 0.0
    %824 = vmatprep.subr.mxu0 0.0
    %825 = vmatpush1.msra.mxu0 0.0
    %826 = vmatprep.subr.mxu0 0.0
    %827 = vmatpush1.msra.mxu0 0.0
    %828 = vmatprep.subr.mxu0 0.0
    %829 = vmatpush1.msra.mxu0 0.0
    %830 = vmatprep.subr.mxu0 0.0
    %831 = vmatpush1.msra.mxu0 0.0
    %832 = vmatprep.subr.mxu0 0.0
    %833 = vmatpush1.msra.mxu0 0.0
    %834 = vmatprep.subr.mxu0 0.0
    %835 = vmatpush1.msra.mxu0 0.0
    %836 = vmatprep.subr.mxu0 0.0
    %837 = vmatpush1.msra.mxu0 0.0
    %838 = vmatprep.subr.mxu0 0.0
    %839 = vmatpush1.msra.mxu0 0.0
    %840 = vmatprep.subr.mxu0 0.0
    %841 = vmatpush1.msra.mxu0 0.0
    %842 = vmatprep.mubr.f32.mxu0 0.0
    %843 = vmatmul.mubr.f32.gmra.mrb[0].mxu0 %v728
    %v844 = vpop.f32.mrb[0].mxu0
    %v845 = vadd.f32 %v331, %v844
    %v846 = vpop.f32.mrb[0].mxu0
    %v847 = vadd.f32 %v335, %v846
    %848 = vdwg.mxu0
    %849 = vmatprep.subr.mxu0 0.0
    %850 = vmatpush1.msra.mxu0 %v732
    %851 = vmatprep.subr.mxu0 0.0
    %852 = vmatpush1.msra.mxu0 %v735
    %853 = vmatprep.subr.mxu0 0.0
    %854 = vmatpush1.msra.mxu0 %v738
    %855 = vmatprep.subr.mxu0 0.0
    %856 = vmatpush1.msra.mxu0 %v741
    %857 = vmatprep.subr.mxu0 0.0
    %858 = vmatpush1.msra.mxu0 %v744
    %859 = vmatprep.subr.mxu0 0.0
    %860 = vmatpush1.msra.mxu0 %v747
    %861 = vmatprep.subr.mxu0 0.0
    %862 = vmatpush1.msra.mxu0 %v750
    %863 = vmatprep.subr.mxu0 0.0
    %864 = vmatpush1.msra.mxu0 %v753
    %865 = vmatprep.subr.mxu0 0.0
    %866 = vmatpush1.msra.mxu0 %v756
    %867 = vmatprep.subr.mxu0 0.0
    %868 = vmatpush1.msra.mxu0 %v759
    %869 = vmatprep.subr.mxu0 0.0
    %870 = vmatpush1.msra.mxu0 %v762
    %871 = vmatprep.subr.mxu0 0.0
    %872 = vmatpush1.msra.mxu0 %v765
    %873 = vmatprep.subr.mxu0 0.0
    %874 = vmatpush1.msra.mxu0 %v768
    %875 = vmatprep.subr.mxu0 0.0
    %876 = vmatpush1.msra.mxu0 %v771
    %877 = vmatprep.subr.mxu0 0.0
    %878 = vmatpush1.msra.mxu0 %v774
    %879 = vmatprep.subr.mxu0 0.0
    %880 = vmatpush1.msra.mxu0 %v777
    %881 = vmatprep.subr.mxu0 0.0
    %882 = vmatpush1.msra.mxu0 0.0
    %883 = vmatprep.subr.mxu0 0.0
    %884 = vmatpush1.msra.mxu0 0.0
    %885 = vmatprep.subr.mxu0 0.0
    %886 = vmatpush1.msra.mxu0 0.0
    %887 = vmatprep.subr.mxu0 0.0
    %888 = vmatpush1.msra.mxu0 0.0
    %889 = vmatprep.subr.mxu0 0.0
    %890 = vmatpush1.msra.mxu0 0.0
    %891 = vmatprep.subr.mxu0 0.0
    %892 = vmatpush1.msra.mxu0 0.0
    %893 = vmatprep.subr.mxu0 0.0
    %894 = vmatpush1.msra.mxu0 0.0
    %895 = vmatprep.subr.mxu0 0.0
    %896 = vmatpush1.msra.mxu0 0.0
    %897 = vmatprep.subr.mxu0 0.0
    %898 = vmatpush1.msra.mxu0 0.0
    %899 = vmatprep.subr.mxu0 0.0
    %900 = vmatpush1.msra.mxu0 0.0
    %901 = vmatprep.subr.mxu0 0.0
    %902 = vmatpush1.msra.mxu0 0.0
    %903 = vmatprep.subr.mxu0 0.0
    %904 = vmatpush1.msra.mxu0 0.0
    %905 = vmatprep.subr.mxu0 0.0
    %906 = vmatpush1.msra.mxu0 0.0
    %907 = vmatprep.subr.mxu0 0.0
    %908 = vmatpush1.msra.mxu0 0.0
    %909 = vmatprep.subr.mxu0 0.0
    %910 = vmatpush1.msra.mxu0 0.0
    %911 = vmatprep.subr.mxu0 0.0
    %912 = vmatpush1.msra.mxu0 0.0
    %913 = vmatprep.mubr.f32.mxu0 0.0
    %914 = vmatmul.mubr.f32.gmra.mrb[0].mxu0 %v728
    %v915 = vpop.f32.mrb[0].mxu0
    %v916 = vadd.f32 %v339, %v915
    %v917 = vpop.f32.mrb[0].mxu0
    %918 = vdwg.mxu0
    %s919 = scalar_lea.vmem [#allocation3], 2
    %v920 = vld [vmem:[%s919] ss:$8 sm:$0x7]
    %v921 = vadd.f32 %v920, %v845
    %v922 = vxor.u32 %v921, 2147483648
    %v923 = vmul.f32 %v922, 1.442695
    %v924 = vpow.pop %v923
    %v925 = vadd.f32 %v924, 1.0
    %v926 = vrcp.pop %v925
    %v927 = vmul.f32 1.0, %v926
    %v929 = vrot.slane %v920, 1
    %v931 = vadd.f32 %v929, %v847
    %v932 = vxor.u32 %v931, 2147483648
    %v933 = vmul.f32 %v932, 1.442695
    %v934 = vpow.pop %v933
    %v935 = vadd.f32 %v934, 1.0
    %v936 = vrcp.pop %v935
    %v937 = vmul.f32 1.0, %v936
    %v938 = vmul.f32 %v927, %v916
    %v939 = vrot.slane %v920, 2
    %v941 = vadd.f32 %v939, %v938
    %v942 = vtanh.pop %v941
    %v943 = vsub.f32 1.0, %v937
    %v944 = vmul.f32 %v943, %v942
    %v945 = vmul.f32 %v937, %v728
    %v946 = vadd.f32 %v944, %v945
    %947 = vst [vmem:[#allocation10 + $0x2] sm:$0x1] %v946
    %v948 = vld [vmem:[#allocation9] sm:$0xff]
    %v949 = vld [vmem:[#allocation9 + $0x8] sm:$0xff]
    %v950 = vld [vmem:[#allocation9 + $0x10] sm:$0xff]
    %v951 = vld [vmem:[#allocation9 + $0x18] sm:$0xff]
    %v952 = vld [vmem:[#allocation9 + $0x20] sm:$0xff]
    %v953 = vld [vmem:[#allocation9 + $0x28] sm:$0xff]
    %v954 = vld [vmem:[#allocation9 + $0x30] sm:$0xff]
    %v955 = vld [vmem:[#allocation9 + $0x38] sm:$0xff]
    %v956 = vld [vmem:[#allocation9 + $0x40] sm:$0xff]
    %v957 = vld [vmem:[#allocation9 + $0x48] sm:$0xff]
    %v958 = vld [vmem:[#allocation9 + $0x50] sm:$0xff]
    %v959 = vld [vmem:[#allocation9 + $0x58] sm:$0xff]
    %v960 = vld [vmem:[#allocation9 + $0x60] sm:$0xff]
    %v961 = vld [vmem:[#allocation9 + $0x68] sm:$0xff]
    %v962 = vld [vmem:[#allocation9 + $0x70] sm:$0xff]
    %v963 = vld [vmem:[#allocation9 + $0x78] sm:$0xff]
    %v964 = vld [vmem:[#allocation9 + $0x80] sm:$0xff]
    %v965 = vld [vmem:[#allocation9 + $0x88] sm:$0xff]
    %v966 = vld [vmem:[#allocation9 + $0x90] sm:$0xff]
    %v967 = vld [vmem:[#allocation9 + $0x98] sm:$0xff]
    %v968 = vld [vmem:[#allocation9 + $0xa0] sm:$0xff]
    %v969 = vld [vmem:[#allocation9 + $0xa8] sm:$0xff]
    %v970 = vld [vmem:[#allocation9 + $0xb0] sm:$0xff]
    %v971 = vld [vmem:[#allocation9 + $0xb8] sm:$0xff]
    %v972 = vld [vmem:[#allocation9 + $0xc0] sm:$0xff]
    %v973 = vld [vmem:[#allocation9 + $0xc8] sm:$0xff]
    %v974 = vld [vmem:[#allocation9 + $0xd0] sm:$0xff]
    %v975 = vld [vmem:[#allocation9 + $0xd8] sm:$0xff]
    %v976 = vld [vmem:[#allocation9 + $0xe0] sm:$0xff]
    %v977 = vld [vmem:[#allocation9 + $0xe8] sm:$0xff]
    %v978 = vld [vmem:[#allocation9 + $0xf0] sm:$0xff]
    %v979 = vld [vmem:[#allocation9 + $0xf8] sm:$0xff]
    %v980 = vld [vmem:[#allocation9 + $0x100] sm:$0xff]
    %v981 = vld [vmem:[#allocation9 + $0x108] sm:$0xff]
    %v982 = vld [vmem:[#allocation9 + $0x110] sm:$0xff]
    %v983 = vld [vmem:[#allocation9 + $0x118] sm:$0xff]
    %v984 = vld [vmem:[#allocation9 + $0x120] sm:$0xff]
    %v985 = vld [vmem:[#allocation9 + $0x128] sm:$0xff]
    %v986 = vld [vmem:[#allocation9 + $0x130] sm:$0xff]
    %v987 = vld [vmem:[#allocation9 + $0x138] sm:$0xff]
    %v988 = vld [vmem:[#allocation9 + $0x140] sm:$0xff]
    %v989 = vld [vmem:[#allocation9 + $0x148] sm:$0xff]
    %v990 = vld [vmem:[#allocation9 + $0x150] sm:$0xff]
    %v991 = vld [vmem:[#allocation9 + $0x158] sm:$0xff]
    %v992 = vld [vmem:[#allocation9 + $0x160] sm:$0xff]
    %v993 = vld [vmem:[#allocation9 + $0x168] sm:$0xff]
    %v994 = vld [vmem:[#allocation9 + $0x170] sm:$0xff]
    %v995 = vld [vmem:[#allocation9 + $0x178] sm:$0xff]
    %996 = vmatprep.subr.mxu0 %v949
    %997 = vmatpush1.msra.mxu0 %v948
    %998 = vmatprep.subr.mxu0 %v952
    %999 = vmatpush1.msra.mxu0 %v951
    %1000 = vmatprep.subr.mxu0 %v955
    %1001 = vmatpush1.msra.mxu0 %v954
    %1002 = vmatprep.subr.mxu0 %v958
    %1003 = vmatpush1.msra.mxu0 %v957
    %1004 = vmatprep.subr.mxu0 %v961
    %1005 = vmatpush1.msra.mxu0 %v960
    %1006 = vmatprep.subr.mxu0 %v964
    %1007 = vmatpush1.msra.mxu0 %v963
    %1008 = vmatprep.subr.mxu0 %v967
    %1009 = vmatpush1.msra.mxu0 %v966
    %1010 = vmatprep.subr.mxu0 %v970
    %1011 = vmatpush1.msra.mxu0 %v969
    %1012 = vmatprep.subr.mxu0 %v973
    %1013 = vmatpush1.msra.mxu0 %v972
    %1014 = vmatprep.subr.mxu0 %v976
    %1015 = vmatpush1.msra.mxu0 %v975
    %1016 = vmatprep.subr.mxu0 %v979
    %1017 = vmatpush1.msra.mxu0 %v978
    %1018 = vmatprep.subr.mxu0 %v982
    %1019 = vmatpush1.msra.mxu0 %v981
    %1020 = vmatprep.subr.mxu0 %v985
    %1021 = vmatpush1.msra.mxu0 %v984
    %1022 = vmatprep.subr.mxu0 %v988
    %1023 = vmatpush1.msra.mxu0 %v987
    %1024 = vmatprep.subr.mxu0 %v991
    %1025 = vmatpush1.msra.mxu0 %v990
    %1026 = vmatprep.subr.mxu0 %v994
    %1027 = vmatpush1.msra.mxu0 %v993
    %1028 = vmatprep.subr.mxu0 0.0
    %1029 = vmatpush1.msra.mxu0 0.0
    %1030 = vmatprep.subr.mxu0 0.0
    %1031 = vmatpush1.msra.mxu0 0.0
    %1032 = vmatprep.subr.mxu0 0.0
    %1033 = vmatpush1.msra.mxu0 0.0
    %1034 = vmatprep.subr.mxu0 0.0
    %1035 = vmatpush1.msra.mxu0 0.0
    %1036 = vmatprep.subr.mxu0 0.0
    %1037 = vmatpush1.msra.mxu0 0.0
    %1038 = vmatprep.subr.mxu0 0.0
    %1039 = vmatpush1.msra.mxu0 0.0
    %1040 = vmatprep.subr.mxu0 0.0
    %1041 = vmatpush1.msra.mxu0 0.0
    %1042 = vmatprep.subr.mxu0 0.0
    %1043 = vmatpush1.msra.mxu0 0.0
    %1044 = vmatprep.subr.mxu0 0.0
    %1045 = vmatpush1.msra.mxu0 0.0
    %1046 = vmatprep.subr.mxu0 0.0
    %1047 = vmatpush1.msra.mxu0 0.0
    %1048 = vmatprep.subr.mxu0 0.0
    %1049 = vmatpush1.msra.mxu0 0.0
    %1050 = vmatprep.subr.mxu0 0.0
    %1051 = vmatpush1.msra.mxu0 0.0
    %1052 = vmatprep.subr.mxu0 0.0
    %1053 = vmatpush1.msra.mxu0 0.0
    %1054 = vmatprep.subr.mxu0 0.0
    %1055 = vmatpush1.msra.mxu0 0.0
    %1056 = vmatprep.subr.mxu0 0.0
    %1057 = vmatpush1.msra.mxu0 0.0
    %1058 = vmatprep.subr.mxu0 0.0
    %1059 = vmatpush1.msra.mxu0 0.0
    %1060 = vmatprep.mubr.f32.mxu0 0.0
    %1061 = vmatmul.mubr.f32.gmra.mrb[0].mxu0 %v946
    %v1062 = vpop.f32.mrb[0].mxu0
    %v1063 = vadd.f32 %v331, %v1062
    %v1064 = vpop.f32.mrb[0].mxu0
    %v1065 = vadd.f32 %v335, %v1064
    %1066 = vdwg.mxu0
    %1067 = vmatprep.subr.mxu0 0.0
    %1068 = vmatpush1.msra.mxu0 %v950
    %1069 = vmatprep.subr.mxu0 0.0
    %1070 = vmatpush1.msra.mxu0 %v953
    %1071 = vmatprep.subr.mxu0 0.0
    %1072 = vmatpush1.msra.mxu0 %v956
    %1073 = vmatprep.subr.mxu0 0.0
    %1074 = vmatpush1.msra.mxu0 %v959
    %1075 = vmatprep.subr.mxu0 0.0
    %1076 = vmatpush1.msra.mxu0 %v962
    %1077 = vmatprep.subr.mxu0 0.0
    %1078 = vmatpush1.msra.mxu0 %v965
    %1079 = vmatprep.subr.mxu0 0.0
    %1080 = vmatpush1.msra.mxu0 %v968
    %1081 = vmatprep.subr.mxu0 0.0
    %1082 = vmatpush1.msra.mxu0 %v971
    %1083 = vmatprep.subr.mxu0 0.0
    %1084 = vmatpush1.msra.mxu0 %v974
    %1085 = vmatprep.subr.mxu0 0.0
    %1086 = vmatpush1.msra.mxu0 %v977
    %1087 = vmatprep.subr.mxu0 0.0
    %1088 = vmatpush1.msra.mxu0 %v980
    %1089 = vmatprep.subr.mxu0 0.0
    %1090 = vmatpush1.msra.mxu0 %v983
    %1091 = vmatprep.subr.mxu0 0.0
    %1092 = vmatpush1.msra.mxu0 %v986
    %1093 = vmatprep.subr.mxu0 0.0
    %1094 = vmatpush1.msra.mxu0 %v989
    %1095 = vmatprep.subr.mxu0 0.0
    %1096 = vmatpush1.msra.mxu0 %v992
    %1097 = vmatprep.subr.mxu0 0.0
    %1098 = vmatpush1.msra.mxu0 %v995
    %1099 = vmatprep.subr.mxu0 0.0
    %1100 = vmatpush1.msra.mxu0 0.0
    %1101 = vmatprep.subr.mxu0 0.0
    %1102 = vmatpush1.msra.mxu0 0.0
    %1103 = vmatprep.subr.mxu0 0.0
    %1104 = vmatpush1.msra.mxu0 0.0
    %1105 = vmatprep.subr.mxu0 0.0
    %1106 = vmatpush1.msra.mxu0 0.0
    %1107 = vmatprep.subr.mxu0 0.0
    %1108 = vmatpush1.msra.mxu0 0.0
    %1109 = vmatprep.subr.mxu0 0.0
    %1110 = vmatpush1.msra.mxu0 0.0
    %1111 = vmatprep.subr.mxu0 0.0
    %1112 = vmatpush1.msra.mxu0 0.0
    %1113 = vmatprep.subr.mxu0 0.0
    %1114 = vmatpush1.msra.mxu0 0.0
    %1115 = vmatprep.subr.mxu0 0.0
    %1116 = vmatpush1.msra.mxu0 0.0
    %1117 = vmatprep.subr.mxu0 0.0
    %1118 = vmatpush1.msra.mxu0 0.0
    %1119 = vmatprep.subr.mxu0 0.0
    %1120 = vmatpush1.msra.mxu0 0.0
    %1121 = vmatprep.subr.mxu0 0.0
    %1122 = vmatpush1.msra.mxu0 0.0
    %1123 = vmatprep.subr.mxu0 0.0
    %1124 = vmatpush1.msra.mxu0 0.0
    %1125 = vmatprep.subr.mxu0 0.0
    %1126 = vmatpush1.msra.mxu0 0.0
    %1127 = vmatprep.subr.mxu0 0.0
    %1128 = vmatpush1.msra.mxu0 0.0
    %1129 = vmatprep.subr.mxu0 0.0
    %1130 = vmatpush1.msra.mxu0 0.0
    %1131 = vmatprep.mubr.f32.mxu0 0.0
    %1132 = vmatmul.mubr.f32.gmra.mrb[0].mxu0 %v946
    %v1133 = vpop.f32.mrb[0].mxu0
    %v1134 = vadd.f32 %v339, %v1133
    %v1135 = vpop.f32.mrb[0].mxu0
    %1136 = vdwg.mxu0
    %s1137 = scalar_lea.vmem [#allocation3], 3
    %v1138 = vld [vmem:[%s1137] ss:$8 sm:$0x7]
    %v1139 = vadd.f32 %v1138, %v1063
    %v1140 = vxor.u32 %v1139, 2147483648
    %v1141 = vmul.f32 %v1140, 1.442695
    %v1142 = vpow.pop %v1141
    %v1143 = vadd.f32 %v1142, 1.0
    %v1144 = vrcp.pop %v1143
    %v1145 = vmul.f32 1.0, %v1144
    %v1147 = vrot.slane %v1138, 1
    %v1149 = vadd.f32 %v1147, %v1065
    %v1150 = vxor.u32 %v1149, 2147483648
    %v1151 = vmul.f32 %v1150, 1.442695
    %v1152 = vpow.pop %v1151
    %v1153 = vadd.f32 %v1152, 1.0
    %v1154 = vrcp.pop %v1153
    %v1155 = vmul.f32 1.0, %v1154
    %v1156 = vmul.f32 %v1145, %v1134
    %v1157 = vrot.slane %v1138, 2
    %v1159 = vadd.f32 %v1157, %v1156
    %v1160 = vtanh.pop %v1159
    %v1161 = vsub.f32 1.0, %v1155
    %v1162 = vmul.f32 %v1161, %v1160
    %v1163 = vmul.f32 %v1155, %v946
    %v1164 = vadd.f32 %v1162, %v1163
    %1165 = vst [vmem:[#allocation10 + $0x3] sm:$0x1] %v1164
    %v1166 = vld [vmem:[#allocation9] sm:$0xff]
    %v1167 = vld [vmem:[#allocation9 + $0x8] sm:$0xff]
    %v1168 = vld [vmem:[#allocation9 + $0x10] sm:$0xff]
    %v1169 = vld [vmem:[#allocation9 + $0x18] sm:$0xff]
    %v1170 = vld [vmem:[#allocation9 + $0x20] sm:$0xff]
    %v1171 = vld [vmem:[#allocation9 + $0x28] sm:$0xff]
    %v1172 = vld [vmem:[#allocation9 + $0x30] sm:$0xff]
    %v1173 = vld [vmem:[#allocation9 + $0x38] sm:$0xff]
    %v1174 = vld [vmem:[#allocation9 + $0x40] sm:$0xff]
    %v1175 = vld [vmem:[#allocation9 + $0x48] sm:$0xff]
    %v1176 = vld [vmem:[#allocation9 + $0x50] sm:$0xff]
    %v1177 = vld [vmem:[#allocation9 + $0x58] sm:$0xff]
    %v1178 = vld [vmem:[#allocation9 + $0x60] sm:$0xff]
    %v1179 = vld [vmem:[#allocation9 + $0x68] sm:$0xff]
    %v1180 = vld [vmem:[#allocation9 + $0x70] sm:$0xff]
    %v1181 = vld [vmem:[#allocation9 + $0x78] sm:$0xff]
    %v1182 = vld [vmem:[#allocation9 + $0x80] sm:$0xff]
    %v1183 = vld [vmem:[#allocation9 + $0x88] sm:$0xff]
    %v1184 = vld [vmem:[#allocation9 + $0x90] sm:$0xff]
    %v1185 = vld [vmem:[#allocation9 + $0x98] sm:$0xff]
    %v1186 = vld [vmem:[#allocation9 + $0xa0] sm:$0xff]
    %v1187 = vld [vmem:[#allocation9 + $0xa8] sm:$0xff]
    %v1188 = vld [vmem:[#allocation9 + $0xb0] sm:$0xff]
    %v1189 = vld [vmem:[#allocation9 + $0xb8] sm:$0xff]
    %v1190 = vld [vmem:[#allocation9 + $0xc0] sm:$0xff]
    %v1191 = vld [vmem:[#allocation9 + $0xc8] sm:$0xff]
    %v1192 = vld [vmem:[#allocation9 + $0xd0] sm:$0xff]
    %v1193 = vld [vmem:[#allocation9 + $0xd8] sm:$0xff]
    %v1194 = vld [vmem:[#allocation9 + $0xe0] sm:$0xff]
    %v1195 = vld [vmem:[#allocation9 + $0xe8] sm:$0xff]
    %v1196 = vld [vmem:[#allocation9 + $0xf0] sm:$0xff]
    %v1197 = vld [vmem:[#allocation9 + $0xf8] sm:$0xff]
    %v1198 = vld [vmem:[#allocation9 + $0x100] sm:$0xff]
    %v1199 = vld [vmem:[#allocation9 + $0x108] sm:$0xff]
    %v1200 = vld [vmem:[#allocation9 + $0x110] sm:$0xff]
    %v1201 = vld [vmem:[#allocation9 + $0x118] sm:$0xff]
    %v1202 = vld [vmem:[#allocation9 + $0x120] sm:$0xff]
    %v1203 = vld [vmem:[#allocation9 + $0x128] sm:$0xff]
    %v1204 = vld [vmem:[#allocation9 + $0x130] sm:$0xff]
    %v1205 = vld [vmem:[#allocation9 + $0x138] sm:$0xff]
    %v1206 = vld [vmem:[#allocation9 + $0x140] sm:$0xff]
    %v1207 = vld [vmem:[#allocation9 + $0x148] sm:$0xff]
    %v1208 = vld [vmem:[#allocation9 + $0x150] sm:$0xff]
    %v1209 = vld [vmem:[#allocation9 + $0x158] sm:$0xff]
    %v1210 = vld [vmem:[#allocation9 + $0x160] sm:$0xff]
    %v1211 = vld [vmem:[#allocation9 + $0x168] sm:$0xff]
    %v1212 = vld [vmem:[#allocation9 + $0x170] sm:$0xff]
    %v1213 = vld [vmem:[#allocation9 + $0x178] sm:$0xff]
    %1214 = vmatprep.subr.mxu0 %v1167
    %1215 = vmatpush1.msra.mxu0 %v1166
    %1216 = vmatprep.subr.mxu0 %v1170
    %1217 = vmatpush1.msra.mxu0 %v1169
    %1218 = vmatprep.subr.mxu0 %v1173
    %1219 = vmatpush1.msra.mxu0 %v1172
    %1220 = vmatprep.subr.mxu0 %v1176
    %1221 = vmatpush1.msra.mxu0 %v1175
    %1222 = vmatprep.subr.mxu0 %v1179
    %1223 = vmatpush1.msra.mxu0 %v1178
    %1224 = vmatprep.subr.mxu0 %v1182
    %1225 = vmatpush1.msra.mxu0 %v1181
    %1226 = vmatprep.subr.mxu0 %v1185
    %1227 = vmatpush1.msra.mxu0 %v1184
    %1228 = vmatprep.subr.mxu0 %v1188
    %1229 = vmatpush1.msra.mxu0 %v1187
    %1230 = vmatprep.subr.mxu0 %v1191
    %1231 = vmatpush1.msra.mxu0 %v1190
    %1232 = vmatprep.subr.mxu0 %v1194
    %1233 = vmatpush1.msra.mxu0 %v1193
    %1234 = vmatprep.subr.mxu0 %v1197
    %1235 = vmatpush1.msra.mxu0 %v1196
    %1236 = vmatprep.subr.mxu0 %v1200
    %1237 = vmatpush1.msra.mxu0 %v1199
    %1238 = vmatprep.subr.mxu0 %v1203
    %1239 = vmatpush1.msra.mxu0 %v1202
    %1240 = vmatprep.subr.mxu0 %v1206
    %1241 = vmatpush1.msra.mxu0 %v1205
    %1242 = vmatprep.subr.mxu0 %v1209
    %1243 = vmatpush1.msra.mxu0 %v1208
    %1244 = vmatprep.subr.mxu0 %v1212
    %1245 = vmatpush1.msra.mxu0 %v1211
    %1246 = vmatprep.subr.mxu0 0.0
    %1247 = vmatpush1.msra.mxu0 0.0
    %1248 = vmatprep.subr.mxu0 0.0
    %1249 = vmatpush1.msra.mxu0 0.0
    %1250 = vmatprep.subr.mxu0 0.0
    %1251 = vmatpush1.msra.mxu0 0.0
    %1252 = vmatprep.subr.mxu0 0.0
    %1253 = vmatpush1.msra.mxu0 0.0
    %1254 = vmatprep.subr.mxu0 0.0
    %1255 = vmatpush1.msra.mxu0 0.0
    %1256 = vmatprep.subr.mxu0 0.0
    %1257 = vmatpush1.msra.mxu0 0.0
    %1258 = vmatprep.subr.mxu0 0.0
    %1259 = vmatpush1.msra.mxu0 0.0
    %1260 = vmatprep.subr.mxu0 0.0
    %1261 = vmatpush1.msra.mxu0 0.0
    %1262 = vmatprep.subr.mxu0 0.0
    %1263 = vmatpush1.msra.mxu0 0.0
    %1264 = vmatprep.subr.mxu0 0.0
    %1265 = vmatpush1.msra.mxu0 0.0
    %1266 = vmatprep.subr.mxu0 0.0
    %1267 = vmatpush1.msra.mxu0 0.0
    %1268 = vmatprep.subr.mxu0 0.0
    %1269 = vmatpush1.msra.mxu0 0.0
    %1270 = vmatprep.subr.mxu0 0.0
    %1271 = vmatpush1.msra.mxu0 0.0
    %1272 = vmatprep.subr.mxu0 0.0
    %1273 = vmatpush1.msra.mxu0 0.0
    %1274 = vmatprep.subr.mxu0 0.0
    %1275 = vmatpush1.msra.mxu0 0.0
    %1276 = vmatprep.subr.mxu0 0.0
    %1277 = vmatpush1.msra.mxu0 0.0
    %1278 = vmatprep.mubr.f32.mxu0 0.0
    %1279 = vmatmul.mubr.f32.gmra.mrb[0].mxu0 %v1164
    %v1280 = vpop.f32.mrb[0].mxu0
    %v1281 = vadd.f32 %v331, %v1280
    %v1282 = vpop.f32.mrb[0].mxu0
    %v1283 = vadd.f32 %v335, %v1282
    %1284 = vdwg.mxu0
    %1285 = vmatprep.subr.mxu0 0.0
    %1286 = vmatpush1.msra.mxu0 %v1168
    %1287 = vmatprep.subr.mxu0 0.0
    %1288 = vmatpush1.msra.mxu0 %v1171
    %1289 = vmatprep.subr.mxu0 0.0
    %1290 = vmatpush1.msra.mxu0 %v1174
    %1291 = vmatprep.subr.mxu0 0.0
    %1292 = vmatpush1.msra.mxu0 %v1177
    %1293 = vmatprep.subr.mxu0 0.0
    %1294 = vmatpush1.msra.mxu0 %v1180
    %1295 = vmatprep.subr.mxu0 0.0
    %1296 = vmatpush1.msra.mxu0 %v1183
    %1297 = vmatprep.subr.mxu0 0.0
    %1298 = vmatpush1.msra.mxu0 %v1186
    %1299 = vmatprep.subr.mxu0 0.0
    %1300 = vmatpush1.msra.mxu0 %v1189
    %1301 = vmatprep.subr.mxu0 0.0
    %1302 = vmatpush1.msra.mxu0 %v1192
    %1303 = vmatprep.subr.mxu0 0.0
    %1304 = vmatpush1.msra.mxu0 %v1195
    %1305 = vmatprep.subr.mxu0 0.0
    %1306 = vmatpush1.msra.mxu0 %v1198
    %1307 = vmatprep.subr.mxu0 0.0
    %1308 = vmatpush1.msra.mxu0 %v1201
    %1309 = vmatprep.subr.mxu0 0.0
    %1310 = vmatpush1.msra.mxu0 %v1204
    %1311 = vmatprep.subr.mxu0 0.0
    %1312 = vmatpush1.msra.mxu0 %v1207
    %1313 = vmatprep.subr.mxu0 0.0
    %1314 = vmatpush1.msra.mxu0 %v1210
    %1315 = vmatprep.subr.mxu0 0.0
    %1316 = vmatpush1.msra.mxu0 %v1213
    %1317 = vmatprep.subr.mxu0 0.0
    %1318 = vmatpush1.msra.mxu0 0.0
    %1319 = vmatprep.subr.mxu0 0.0
    %1320 = vmatpush1.msra.mxu0 0.0
    %1321 = vmatprep.subr.mxu0 0.0
    %1322 = vmatpush1.msra.mxu0 0.0
    %1323 = vmatprep.subr.mxu0 0.0
    %1324 = vmatpush1.msra.mxu0 0.0
    %1325 = vmatprep.subr.mxu0 0.0
    %1326 = vmatpush1.msra.mxu0 0.0
    %1327 = vmatprep.subr.mxu0 0.0
    %1328 = vmatpush1.msra.mxu0 0.0
    %1329 = vmatprep.subr.mxu0 0.0
    %1330 = vmatpush1.msra.mxu0 0.0
    %1331 = vmatprep.subr.mxu0 0.0
    %1332 = vmatpush1.msra.mxu0 0.0
    %1333 = vmatprep.subr.mxu0 0.0
    %1334 = vmatpush1.msra.mxu0 0.0
    %1335 = vmatprep.subr.mxu0 0.0
    %1336 = vmatpush1.msra.mxu0 0.0
    %1337 = vmatprep.subr.mxu0 0.0
    %1338 = vmatpush1.msra.mxu0 0.0
    %1339 = vmatprep.subr.mxu0 0.0
    %1340 = vmatpush1.msra.mxu0 0.0
    %1341 = vmatprep.subr.mxu0 0.0
    %1342 = vmatpush1.msra.mxu0 0.0
    %1343 = vmatprep.subr.mxu0 0.0
    %1344 = vmatpush1.msra.mxu0 0.0
    %1345 = vmatprep.subr.mxu0 0.0
    %1346 = vmatpush1.msra.mxu0 0.0
    %1347 = vmatprep.subr.mxu0 0.0
    %1348 = vmatpush1.msra.mxu0 0.0
    %1349 = vmatprep.mubr.f32.mxu0 0.0
    %1350 = vmatmul.mubr.f32.gmra.mrb[0].mxu0 %v1164
    %v1351 = vpop.f32.mrb[0].mxu0
    %v1352 = vadd.f32 %v339, %v1351
    %v1353 = vpop.f32.mrb[0].mxu0
    %1354 = vdwg.mxu0
    %s1355 = scalar_lea.vmem [#allocation3], 4
    %v1356 = vld [vmem:[%s1355] ss:$8 sm:$0x7]
    %v1357 = vadd.f32 %v1356, %v1281
    %v1358 = vxor.u32 %v1357, 2147483648
    %v1359 = vmul.f32 %v1358, 1.442695
    %v1360 = vpow.pop %v1359
    %v1361 = vadd.f32 %v1360, 1.0
    %v1362 = vrcp.pop %v1361
    %v1363 = vmul.f32 1.0, %v1362
    %v1365 = vrot.slane %v1356, 1
    %v1367 = vadd.f32 %v1365, %v1283
    %v1368 = vxor.u32 %v1367, 2147483648
    %v1369 = vmul.f32 %v1368, 1.442695
    %v1370 = vpow.pop %v1369
    %v1371 = vadd.f32 %v1370, 1.0
    %v1372 = vrcp.pop %v1371
    %v1373 = vmul.f32 1.0, %v1372
    %v1374 = vmul.f32 %v1363, %v1352
    %v1375 = vrot.slane %v1356, 2
    %v1377 = vadd.f32 %v1375, %v1374
    %v1378 = vtanh.pop %v1377
    %v1379 = vsub.f32 1.0, %v1373
    %v1380 = vmul.f32 %v1379, %v1378
    %v1381 = vmul.f32 %v1373, %v1164
    %v1382 = vadd.f32 %v1380, %v1381
    %1383 = vst [vmem:[#allocation10 + $0x4] sm:$0x1] %v1382
    %v1384 = vld [vmem:[#allocation9] sm:$0xff]
    %v1385 = vld [vmem:[#allocation9 + $0x8] sm:$0xff]
    %v1386 = vld [vmem:[#allocation9 + $0x10] sm:$0xff]
    %v1387 = vld [vmem:[#allocation9 + $0x18] sm:$0xff]
    %v1388 = vld [vmem:[#allocation9 + $0x20] sm:$0xff]
    %v1389 = vld [vmem:[#allocation9 + $0x28] sm:$0xff]
    %v1390 = vld [vmem:[#allocation9 + $0x30] sm:$0xff]
    %v1391 = vld [vmem:[#allocation9 + $0x38] sm:$0xff]
    %v1392 = vld [vmem:[#allocation9 + $0x40] sm:$0xff]
    %v1393 = vld [vmem:[#allocation9 + $0x48] sm:$0xff]
    %v1394 = vld [vmem:[#allocation9 + $0x50] sm:$0xff]
    %v1395 = vld [vmem:[#allocation9 + $0x58] sm:$0xff]
    %v1396 = vld [vmem:[#allocation9 + $0x60] sm:$0xff]
    %v1397 = vld [vmem:[#allocation9 + $0x68] sm:$0xff]
    %v1398 = vld [vmem:[#allocation9 + $0x70] sm:$0xff]
    %v1399 = vld [vmem:[#allocation9 + $0x78] sm:$0xff]
    %v1400 = vld [vmem:[#allocation9 + $0x80] sm:$0xff]
    %v1401 = vld [vmem:[#allocation9 + $0x88] sm:$0xff]
    %v1402 = vld [vmem:[#allocation9 + $0x90] sm:$0xff]
    %v1403 = vld [vmem:[#allocation9 + $0x98] sm:$0xff]
    %v1404 = vld [vmem:[#allocation9 + $0xa0] sm:$0xff]
    %v1405 = vld [vmem:[#allocation9 + $0xa8] sm:$0xff]
    %v1406 = vld [vmem:[#allocation9 + $0xb0] sm:$0xff]
    %v1407 = vld [vmem:[#allocation9 + $0xb8] sm:$0xff]
    %v1408 = vld [vmem:[#allocation9 + $0xc0] sm:$0xff]
    %v1409 = vld [vmem:[#allocation9 + $0xc8] sm:$0xff]
    %v1410 = vld [vmem:[#allocation9 + $0xd0] sm:$0xff]
    %v1411 = vld [vmem:[#allocation9 + $0xd8] sm:$0xff]
    %v1412 = vld [vmem:[#allocation9 + $0xe0] sm:$0xff]
    %v1413 = vld [vmem:[#allocation9 + $0xe8] sm:$0xff]
    %v1414 = vld [vmem:[#allocation9 + $0xf0] sm:$0xff]
    %v1415 = vld [vmem:[#allocation9 + $0xf8] sm:$0xff]
    %v1416 = vld [vmem:[#allocation9 + $0x100] sm:$0xff]
    %v1417 = vld [vmem:[#allocation9 + $0x108] sm:$0xff]
    %v1418 = vld [vmem:[#allocation9 + $0x110] sm:$0xff]
    %v1419 = vld [vmem:[#allocation9 + $0x118] sm:$0xff]
    %v1420 = vld [vmem:[#allocation9 + $0x120] sm:$0xff]
    %v1421 = vld [vmem:[#allocation9 + $0x128] sm:$0xff]
    %v1422 = vld [vmem:[#allocation9 + $0x130] sm:$0xff]
    %v1423 = vld [vmem:[#allocation9 + $0x138] sm:$0xff]
    %v1424 = vld [vmem:[#allocation9 + $0x140] sm:$0xff]
    %v1425 = vld [vmem:[#allocation9 + $0x148] sm:$0xff]
    %v1426 = vld [vmem:[#allocation9 + $0x150] sm:$0xff]
    %v1427 = vld [vmem:[#allocation9 + $0x158] sm:$0xff]
    %v1428 = vld [vmem:[#allocation9 + $0x160] sm:$0xff]
    %v1429 = vld [vmem:[#allocation9 + $0x168] sm:$0xff]
    %v1430 = vld [vmem:[#allocation9 + $0x170] sm:$0xff]
    %v1431 = vld [vmem:[#allocation9 + $0x178] sm:$0xff]
    %1432 = vmatprep.subr.mxu0 %v1385
    %1433 = vmatpush1.msra.mxu0 %v1384
    %1434 = vmatprep.subr.mxu0 %v1388
    %1435 = vmatpush1.msra.mxu0 %v1387
    %1436 = vmatprep.subr.mxu0 %v1391
    %1437 = vmatpush1.msra.mxu0 %v1390
    %1438 = vmatprep.subr.mxu0 %v1394
    %1439 = vmatpush1.msra.mxu0 %v1393
    %1440 = vmatprep.subr.mxu0 %v1397
    %1441 = vmatpush1.msra.mxu0 %v1396
    %1442 = vmatprep.subr.mxu0 %v1400
    %1443 = vmatpush1.msra.mxu0 %v1399
    %1444 = vmatprep.subr.mxu0 %v1403
    %1445 = vmatpush1.msra.mxu0 %v1402
    %1446 = vmatprep.subr.mxu0 %v1406
    %1447 = vmatpush1.msra.mxu0 %v1405
    %1448 = vmatprep.subr.mxu0 %v1409
    %1449 = vmatpush1.msra.mxu0 %v1408
    %1450 = vmatprep.subr.mxu0 %v1412
    %1451 = vmatpush1.msra.mxu0 %v1411
    %1452 = vmatprep.subr.mxu0 %v1415
    %1453 = vmatpush1.msra.mxu0 %v1414
    %1454 = vmatprep.subr.mxu0 %v1418
    %1455 = vmatpush1.msra.mxu0 %v1417
    %1456 = vmatprep.subr.mxu0 %v1421
    %1457 = vmatpush1.msra.mxu0 %v1420
    %1458 = vmatprep.subr.mxu0 %v1424
    %1459 = vmatpush1.msra.mxu0 %v1423
    %1460 = vmatprep.subr.mxu0 %v1427
    %1461 = vmatpush1.msra.mxu0 %v1426
    %1462 = vmatprep.subr.mxu0 %v1430
    %1463 = vmatpush1.msra.mxu0 %v1429
    %1464 = vmatprep.subr.mxu0 0.0
    %1465 = vmatpush1.msra.mxu0 0.0
    %1466 = vmatprep.subr.mxu0 0.0
    %1467 = vmatpush1.msra.mxu0 0.0
    %1468 = vmatprep.subr.mxu0 0.0
    %1469 = vmatpush1.msra.mxu0 0.0
    %1470 = vmatprep.subr.mxu0 0.0
    %1471 = vmatpush1.msra.mxu0 0.0
    %1472 = vmatprep.subr.mxu0 0.0
    %1473 = vmatpush1.msra.mxu0 0.0
    %1474 = vmatprep.subr.mxu0 0.0
    %1475 = vmatpush1.msra.mxu0 0.0
    %1476 = vmatprep.subr.mxu0 0.0
    %1477 = vmatpush1.msra.mxu0 0.0
    %1478 = vmatprep.subr.mxu0 0.0
    %1479 = vmatpush1.msra.mxu0 0.0
    %1480 = vmatprep.subr.mxu0 0.0
    %1481 = vmatpush1.msra.mxu0 0.0
    %1482 = vmatprep.subr.mxu0 0.0
    %1483 = vmatpush1.msra.mxu0 0.0
    %1484 = vmatprep.subr.mxu0 0.0
    %1485 = vmatpush1.msra.mxu0 0.0
    %1486 = vmatprep.subr.mxu0 0.0
    %1487 = vmatpush1.msra.mxu0 0.0
    %1488 = vmatprep.subr.mxu0 0.0
    %1489 = vmatpush1.msra.mxu0 0.0
    %1490 = vmatprep.subr.mxu0 0.0
    %1491 = vmatpush1.msra.mxu0 0.0
    %1492 = vmatprep.subr.mxu0 0.0
    %1493 = vmatpush1.msra.mxu0 0.0
    %1494 = vmatprep.subr.mxu0 0.0
    %1495 = vmatpush1.msra.mxu0 0.0
    %1496 = vmatprep.mubr.f32.mxu0 0.0
    %1497 = vmatmul.mubr.f32.gmra.mrb[0].mxu0 %v1382
    %v1498 = vpop.f32.mrb[0].mxu0
    %v1499 = vadd.f32 %v331, %v1498
    %v1500 = vpop.f32.mrb[0].mxu0
    %v1501 = vadd.f32 %v335, %v1500
    %1502 = vdwg.mxu0
    %1503 = vmatprep.subr.mxu0 0.0
    %1504 = vmatpush1.msra.mxu0 %v1386
    %1505 = vmatprep.subr.mxu0 0.0
    %1506 = vmatpush1.msra.mxu0 %v1389
    %1507 = vmatprep.subr.mxu0 0.0
    %1508 = vmatpush1.msra.mxu0 %v1392
    %1509 = vmatprep.subr.mxu0 0.0
    %1510 = vmatpush1.msra.mxu0 %v1395
    %1511 = vmatprep.subr.mxu0 0.0
    %1512 = vmatpush1.msra.mxu0 %v1398
    %1513 = vmatprep.subr.mxu0 0.0
    %1514 = vmatpush1.msra.mxu0 %v1401
    %1515 = vmatprep.subr.mxu0 0.0
    %1516 = vmatpush1.msra.mxu0 %v1404
    %1517 = vmatprep.subr.mxu0 0.0
    %1518 = vmatpush1.msra.mxu0 %v1407
    %1519 = vmatprep.subr.mxu0 0.0
    %1520 = vmatpush1.msra.mxu0 %v1410
    %1521 = vmatprep.subr.mxu0 0.0
    %1522 = vmatpush1.msra.mxu0 %v1413
    %1523 = vmatprep.subr.mxu0 0.0
    %1524 = vmatpush1.msra.mxu0 %v1416
    %1525 = vmatprep.subr.mxu0 0.0
    %1526 = vmatpush1.msra.mxu0 %v1419
    %1527 = vmatprep.subr.mxu0 0.0
    %1528 = vmatpush1.msra.mxu0 %v1422
    %1529 = vmatprep.subr.mxu0 0.0
    %1530 = vmatpush1.msra.mxu0 %v1425
    %1531 = vmatprep.subr.mxu0 0.0
    %1532 = vmatpush1.msra.mxu0 %v1428
    %1533 = vmatprep.subr.mxu0 0.0
    %1534 = vmatpush1.msra.mxu0 %v1431
    %1535 = vmatprep.subr.mxu0 0.0
    %1536 = vmatpush1.msra.mxu0 0.0
    %1537 = vmatprep.subr.mxu0 0.0
    %1538 = vmatpush1.msra.mxu0 0.0
    %1539 = vmatprep.subr.mxu0 0.0
    %1540 = vmatpush1.msra.mxu0 0.0
    %1541 = vmatprep.subr.mxu0 0.0
    %1542 = vmatpush1.msra.mxu0 0.0
    %1543 = vmatprep.subr.mxu0 0.0
    %1544 = vmatpush1.msra.mxu0 0.0
    %1545 = vmatprep.subr.mxu0 0.0
    %1546 = vmatpush1.msra.mxu0 0.0
    %1547 = vmatprep.subr.mxu0 0.0
    %1548 = vmatpush1.msra.mxu0 0.0
    %1549 = vmatprep.subr.mxu0 0.0
    %1550 = vmatpush1.msra.mxu0 0.0
    %1551 = vmatprep.subr.mxu0 0.0
    %1552 = vmatpush1.msra.mxu0 0.0
    %1553 = vmatprep.subr.mxu0 0.0
    %1554 = vmatpush1.msra.mxu0 0.0
    %1555 = vmatprep.subr.mxu0 0.0
    %1556 = vmatpush1.msra.mxu0 0.0
    %1557 = vmatprep.subr.mxu0 0.0
    %1558 = vmatpush1.msra.mxu0 0.0
    %1559 = vmatprep.subr.mxu0 0.0
    %1560 = vmatpush1.msra.mxu0 0.0
    %1561 = vmatprep.subr.mxu0 0.0
    %1562 = vmatpush1.msra.mxu0 0.0
    %1563 = vmatprep.subr.mxu0 0.0
    %1564 = vmatpush1.msra.mxu0 0.0
    %1565 = vmatprep.subr.mxu0 0.0
    %1566 = vmatpush1.msra.mxu0 0.0
    %1567 = vmatprep.mubr.f32.mxu0 0.0
    %1568 = vmatmul.mubr.f32.gmra.mrb[0].mxu0 %v1382
    %v1569 = vpop.f32.mrb[0].mxu0
    %v1570 = vadd.f32 %v339, %v1569
    %v1571 = vpop.f32.mrb[0].mxu0
    %1572 = vdwg.mxu0
    %s1573 = scalar_lea.vmem [#allocation3], 5
    %v1574 = vld [vmem:[%s1573] ss:$8 sm:$0x7]
    %v1575 = vadd.f32 %v1574, %v1499
    %v1576 = vxor.u32 %v1575, 2147483648
    %v1577 = vmul.f32 %v1576, 1.442695
    %v1578 = vpow.pop %v1577
    %v1579 = vadd.f32 %v1578, 1.0
    %v1580 = vrcp.pop %v1579
    %v1581 = vmul.f32 1.0, %v1580
    %v1583 = vrot.slane %v1574, 1
    %v1585 = vadd.f32 %v1583, %v1501
    %v1586 = vxor.u32 %v1585, 2147483648
    %v1587 = vmul.f32 %v1586, 1.442695
    %v1588 = vpow.pop %v1587
    %v1589 = vadd.f32 %v1588, 1.0
    %v1590 = vrcp.pop %v1589
    %v1591 = vmul.f32 1.0, %v1590
    %v1592 = vmul.f32 %v1581, %v1570
    %v1593 = vrot.slane %v1574, 2
    %v1595 = vadd.f32 %v1593, %v1592
    %v1596 = vtanh.pop %v1595
    %v1597 = vsub.f32 1.0, %v1591
    %v1598 = vmul.f32 %v1597, %v1596
    %v1599 = vmul.f32 %v1591, %v1382
    %v1600 = vadd.f32 %v1598, %v1599
    %1601 = vst [vmem:[#allocation10 + $0x5] sm:$0x1] %v1600
    %v1602 = vld [vmem:[#allocation9] sm:$0xff]
    %v1603 = vld [vmem:[#allocation9 + $0x8] sm:$0xff]
    %v1604 = vld [vmem:[#allocation9 + $0x10] sm:$0xff]
    %v1605 = vld [vmem:[#allocation9 + $0x18] sm:$0xff]
    %v1606 = vld [vmem:[#allocation9 + $0x20] sm:$0xff]
    %v1607 = vld [vmem:[#allocation9 + $0x28] sm:$0xff]
    %v1608 = vld [vmem:[#allocation9 + $0x30] sm:$0xff]
    %v1609 = vld [vmem:[#allocation9 + $0x38] sm:$0xff]
    %v1610 = vld [vmem:[#allocation9 + $0x40] sm:$0xff]
    %v1611 = vld [vmem:[#allocation9 + $0x48] sm:$0xff]
    %v1612 = vld [vmem:[#allocation9 + $0x50] sm:$0xff]
    %v1613 = vld [vmem:[#allocation9 + $0x58] sm:$0xff]
    %v1614 = vld [vmem:[#allocation9 + $0x60] sm:$0xff]
    %v1615 = vld [vmem:[#allocation9 + $0x68] sm:$0xff]
    %v1616 = vld [vmem:[#allocation9 + $0x70] sm:$0xff]
    %v1617 = vld [vmem:[#allocation9 + $0x78] sm:$0xff]
    %v1618 = vld [vmem:[#allocation9 + $0x80] sm:$0xff]
    %v1619 = vld [vmem:[#allocation9 + $0x88] sm:$0xff]
    %v1620 = vld [vmem:[#allocation9 + $0x90] sm:$0xff]
    %v1621 = vld [vmem:[#allocation9 + $0x98] sm:$0xff]
    %v1622 = vld [vmem:[#allocation9 + $0xa0] sm:$0xff]
    %v1623 = vld [vmem:[#allocation9 + $0xa8] sm:$0xff]
    %v1624 = vld [vmem:[#allocation9 + $0xb0] sm:$0xff]
    %v1625 = vld [vmem:[#allocation9 + $0xb8] sm:$0xff]
    %v1626 = vld [vmem:[#allocation9 + $0xc0] sm:$0xff]
    %v1627 = vld [vmem:[#allocation9 + $0xc8] sm:$0xff]
    %v1628 = vld [vmem:[#allocation9 + $0xd0] sm:$0xff]
    %v1629 = vld [vmem:[#allocation9 + $0xd8] sm:$0xff]
    %v1630 = vld [vmem:[#allocation9 + $0xe0] sm:$0xff]
    %v1631 = vld [vmem:[#allocation9 + $0xe8] sm:$0xff]
    %v1632 = vld [vmem:[#allocation9 + $0xf0] sm:$0xff]
    %v1633 = vld [vmem:[#allocation9 + $0xf8] sm:$0xff]
    %v1634 = vld [vmem:[#allocation9 + $0x100] sm:$0xff]
    %v1635 = vld [vmem:[#allocation9 + $0x108] sm:$0xff]
    %v1636 = vld [vmem:[#allocation9 + $0x110] sm:$0xff]
    %v1637 = vld [vmem:[#allocation9 + $0x118] sm:$0xff]
    %v1638 = vld [vmem:[#allocation9 + $0x120] sm:$0xff]
    %v1639 = vld [vmem:[#allocation9 + $0x128] sm:$0xff]
    %v1640 = vld [vmem:[#allocation9 + $0x130] sm:$0xff]
    %v1641 = vld [vmem:[#allocation9 + $0x138] sm:$0xff]
    %v1642 = vld [vmem:[#allocation9 + $0x140] sm:$0xff]
    %v1643 = vld [vmem:[#allocation9 + $0x148] sm:$0xff]
    %v1644 = vld [vmem:[#allocation9 + $0x150] sm:$0xff]
    %v1645 = vld [vmem:[#allocation9 + $0x158] sm:$0xff]
    %v1646 = vld [vmem:[#allocation9 + $0x160] sm:$0xff]
    %v1647 = vld [vmem:[#allocation9 + $0x168] sm:$0xff]
    %v1648 = vld [vmem:[#allocation9 + $0x170] sm:$0xff]
    %v1649 = vld [vmem:[#allocation9 + $0x178] sm:$0xff]
    %1650 = vmatprep.subr.mxu0 %v1603
    %1651 = vmatpush1.msra.mxu0 %v1602
    %1652 = vmatprep.subr.mxu0 %v1606
    %1653 = vmatpush1.msra.mxu0 %v1605
    %1654 = vmatprep.subr.mxu0 %v1609
    %1655 = vmatpush1.msra.mxu0 %v1608
    %1656 = vmatprep.subr.mxu0 %v1612
    %1657 = vmatpush1.msra.mxu0 %v1611
    %1658 = vmatprep.subr.mxu0 %v1615
    %1659 = vmatpush1.msra.mxu0 %v1614
    %1660 = vmatprep.subr.mxu0 %v1618
    %1661 = vmatpush1.msra.mxu0 %v1617
    %1662 = vmatprep.subr.mxu0 %v1621
    %1663 = vmatpush1.msra.mxu0 %v1620
    %1664 = vmatprep.subr.mxu0 %v1624
    %1665 = vmatpush1.msra.mxu0 %v1623
    %1666 = vmatprep.subr.mxu0 %v1627
    %1667 = vmatpush1.msra.mxu0 %v1626
    %1668 = vmatprep.subr.mxu0 %v1630
    %1669 = vmatpush1.msra.mxu0 %v1629
    %1670 = vmatprep.subr.mxu0 %v1633
    %1671 = vmatpush1.msra.mxu0 %v1632
    %1672 = vmatprep.subr.mxu0 %v1636
    %1673 = vmatpush1.msra.mxu0 %v1635
    %1674 = vmatprep.subr.mxu0 %v1639
    %1675 = vmatpush1.msra.mxu0 %v1638
    %1676 = vmatprep.subr.mxu0 %v1642
    %1677 = vmatpush1.msra.mxu0 %v1641
    %1678 = vmatprep.subr.mxu0 %v1645
    %1679 = vmatpush1.msra.mxu0 %v1644
    %1680 = vmatprep.subr.mxu0 %v1648
    %1681 = vmatpush1.msra.mxu0 %v1647
    %1682 = vmatprep.subr.mxu0 0.0
    %1683 = vmatpush1.msra.mxu0 0.0
    %1684 = vmatprep.subr.mxu0 0.0
    %1685 = vmatpush1.msra.mxu0 0.0
    %1686 = vmatprep.subr.mxu0 0.0
    %1687 = vmatpush1.msra.mxu0 0.0
    %1688 = vmatprep.subr.mxu0 0.0
    %1689 = vmatpush1.msra.mxu0 0.0
    %1690 = vmatprep.subr.mxu0 0.0
    %1691 = vmatpush1.msra.mxu0 0.0
    %1692 = vmatprep.subr.mxu0 0.0
    %1693 = vmatpush1.msra.mxu0 0.0
    %1694 = vmatprep.subr.mxu0 0.0
    %1695 = vmatpush1.msra.mxu0 0.0
    %1696 = vmatprep.subr.mxu0 0.0
    %1697 = vmatpush1.msra.mxu0 0.0
    %1698 = vmatprep.subr.mxu0 0.0
    %1699 = vmatpush1.msra.mxu0 0.0
    %1700 = vmatprep.subr.mxu0 0.0
    %1701 = vmatpush1.msra.mxu0 0.0
    %1702 = vmatprep.subr.mxu0 0.0
    %1703 = vmatpush1.msra.mxu0 0.0
    %1704 = vmatprep.subr.mxu0 0.0
    %1705 = vmatpush1.msra.mxu0 0.0
    %1706 = vmatprep.subr.mxu0 0.0
    %1707 = vmatpush1.msra.mxu0 0.0
    %1708 = vmatprep.subr.mxu0 0.0
    %1709 = vmatpush1.msra.mxu0 0.0
    %1710 = vmatprep.subr.mxu0 0.0
    %1711 = vmatpush1.msra.mxu0 0.0
    %1712 = vmatprep.subr.mxu0 0.0
    %1713 = vmatpush1.msra.mxu0 0.0
    %1714 = vmatprep.mubr.f32.mxu0 0.0
    %1715 = vmatmul.mubr.f32.gmra.mrb[0].mxu0 %v1600
    %v1716 = vpop.f32.mrb[0].mxu0
    %v1717 = vadd.f32 %v331, %v1716
    %v1718 = vpop.f32.mrb[0].mxu0
    %v1719 = vadd.f32 %v335, %v1718
    %1720 = vdwg.mxu0
    %1721 = vmatprep.subr.mxu0 0.0
    %1722 = vmatpush1.msra.mxu0 %v1604
    %1723 = vmatprep.subr.mxu0 0.0
    %1724 = vmatpush1.msra.mxu0 %v1607
    %1725 = vmatprep.subr.mxu0 0.0
    %1726 = vmatpush1.msra.mxu0 %v1610
    %1727 = vmatprep.subr.mxu0 0.0
    %1728 = vmatpush1.msra.mxu0 %v1613
    %1729 = vmatprep.subr.mxu0 0.0
    %1730 = vmatpush1.msra.mxu0 %v1616
    %1731 = vmatprep.subr.mxu0 0.0
    %1732 = vmatpush1.msra.mxu0 %v1619
    %1733 = vmatprep.subr.mxu0 0.0
    %1734 = vmatpush1.msra.mxu0 %v1622
    %1735 = vmatprep.subr.mxu0 0.0
    %1736 = vmatpush1.msra.mxu0 %v1625
    %1737 = vmatprep.subr.mxu0 0.0
    %1738 = vmatpush1.msra.mxu0 %v1628
    %1739 = vmatprep.subr.mxu0 0.0
    %1740 = vmatpush1.msra.mxu0 %v1631
    %1741 = vmatprep.subr.mxu0 0.0
    %1742 = vmatpush1.msra.mxu0 %v1634
    %1743 = vmatprep.subr.mxu0 0.0
    %1744 = vmatpush1.msra.mxu0 %v1637
    %1745 = vmatprep.subr.mxu0 0.0
    %1746 = vmatpush1.msra.mxu0 %v1640
    %1747 = vmatprep.subr.mxu0 0.0
    %1748 = vmatpush1.msra.mxu0 %v1643
    %1749 = vmatprep.subr.mxu0 0.0
    %1750 = vmatpush1.msra.mxu0 %v1646
    %1751 = vmatprep.subr.mxu0 0.0
    %1752 = vmatpush1.msra.mxu0 %v1649
    %1753 = vmatprep.subr.mxu0 0.0
    %1754 = vmatpush1.msra.mxu0 0.0
    %1755 = vmatprep.subr.mxu0 0.0
    %1756 = vmatpush1.msra.mxu0 0.0
    %1757 = vmatprep.subr.mxu0 0.0
    %1758 = vmatpush1.msra.mxu0 0.0
    %1759 = vmatprep.subr.mxu0 0.0
    %1760 = vmatpush1.msra.mxu0 0.0
    %1761 = vmatprep.subr.mxu0 0.0
    %1762 = vmatpush1.msra.mxu0 0.0
    %1763 = vmatprep.subr.mxu0 0.0
    %1764 = vmatpush1.msra.mxu0 0.0
    %1765 = vmatprep.subr.mxu0 0.0
    %1766 = vmatpush1.msra.mxu0 0.0
    %1767 = vmatprep.subr.mxu0 0.0
    %1768 = vmatpush1.msra.mxu0 0.0
    %1769 = vmatprep.subr.mxu0 0.0
    %1770 = vmatpush1.msra.mxu0 0.0
    %1771 = vmatprep.subr.mxu0 0.0
    %1772 = vmatpush1.msra.mxu0 0.0
    %1773 = vmatprep.subr.mxu0 0.0
    %1774 = vmatpush1.msra.mxu0 0.0
    %1775 = vmatprep.subr.mxu0 0.0
    %1776 = vmatpush1.msra.mxu0 0.0
    %1777 = vmatprep.subr.mxu0 0.0
    %1778 = vmatpush1.msra.mxu0 0.0
    %1779 = vmatprep.subr.mxu0 0.0
    %1780 = vmatpush1.msra.mxu0 0.0
    %1781 = vmatprep.subr.mxu0 0.0
    %1782 = vmatpush1.msra.mxu0 0.0
    %1783 = vmatprep.subr.mxu0 0.0
    %1784 = vmatpush1.msra.mxu0 0.0
    %1785 = vmatprep.mubr.f32.mxu0 0.0
    %1786 = vmatmul.mubr.f32.gmra.mrb[0].mxu0 %v1600
    %v1787 = vpop.f32.mrb[0].mxu0
    %v1788 = vadd.f32 %v339, %v1787
    %v1789 = vpop.f32.mrb[0].mxu0
    %1790 = vdwg.mxu0
    %s1791 = scalar_lea.vmem [#allocation3], 6
    %v1792 = vld [vmem:[%s1791] ss:$8 sm:$0x7]
    %v1793 = vadd.f32 %v1792, %v1717
    %v1794 = vxor.u32 %v1793, 2147483648
    %v1795 = vmul.f32 %v1794, 1.442695
    %v1796 = vpow.pop %v1795
    %v1797 = vadd.f32 %v1796, 1.0
    %v1798 = vrcp.pop %v1797
    %v1799 = vmul.f32 1.0, %v1798
    %v1801 = vrot.slane %v1792, 1
    %v1803 = vadd.f32 %v1801, %v1719
    %v1804 = vxor.u32 %v1803, 2147483648
    %v1805 = vmul.f32 %v1804, 1.442695
    %v1806 = vpow.pop %v1805
    %v1807 = vadd.f32 %v1806, 1.0
    %v1808 = vrcp.pop %v1807
    %v1809 = vmul.f32 1.0, %v1808
    %v1810 = vmul.f32 %v1799, %v1788
    %v1811 = vrot.slane %v1792, 2
    %v1813 = vadd.f32 %v1811, %v1810
    %v1814 = vtanh.pop %v1813
    %v1815 = vsub.f32 1.0, %v1809
    %v1816 = vmul.f32 %v1815, %v1814
    %v1817 = vmul.f32 %v1809, %v1600
    %v1818 = vadd.f32 %v1816, %v1817
    %1819 = vst [vmem:[#allocation10 + $0x6] sm:$0x1] %v1818
    %v1820 = vld [vmem:[#allocation9] sm:$0xff]
    %v1821 = vld [vmem:[#allocation9 + $0x8] sm:$0xff]
    %v1822 = vld [vmem:[#allocation9 + $0x10] sm:$0xff]
    %v1823 = vld [vmem:[#allocation9 + $0x18] sm:$0xff]
    %v1824 = vld [vmem:[#allocation9 + $0x20] sm:$0xff]
    %v1825 = vld [vmem:[#allocation9 + $0x28] sm:$0xff]
    %v1826 = vld [vmem:[#allocation9 + $0x30] sm:$0xff]
    %v1827 = vld [vmem:[#allocation9 + $0x38] sm:$0xff]
    %v1828 = vld [vmem:[#allocation9 + $0x40] sm:$0xff]
    %v1829 = vld [vmem:[#allocation9 + $0x48] sm:$0xff]
    %v1830 = vld [vmem:[#allocation9 + $0x50] sm:$0xff]
    %v1831 = vld [vmem:[#allocation9 + $0x58] sm:$0xff]
    %v1832 = vld [vmem:[#allocation9 + $0x60] sm:$0xff]
    %v1833 = vld [vmem:[#allocation9 + $0x68] sm:$0xff]
    %v1834 = vld [vmem:[#allocation9 + $0x70] sm:$0xff]
    %v1835 = vld [vmem:[#allocation9 + $0x78] sm:$0xff]
    %v1836 = vld [vmem:[#allocation9 + $0x80] sm:$0xff]
    %v1837 = vld [vmem:[#allocation9 + $0x88] sm:$0xff]
    %v1838 = vld [vmem:[#allocation9 + $0x90] sm:$0xff]
    %v1839 = vld [vmem:[#allocation9 + $0x98] sm:$0xff]
    %v1840 = vld [vmem:[#allocation9 + $0xa0] sm:$0xff]
    %v1841 = vld [vmem:[#allocation9 + $0xa8] sm:$0xff]
    %v1842 = vld [vmem:[#allocation9 + $0xb0] sm:$0xff]
    %v1843 = vld [vmem:[#allocation9 + $0xb8] sm:$0xff]
    %v1844 = vld [vmem:[#allocation9 + $0xc0] sm:$0xff]
    %v1845 = vld [vmem:[#allocation9 + $0xc8] sm:$0xff]
    %v1846 = vld [vmem:[#allocation9 + $0xd0] sm:$0xff]
    %v1847 = vld [vmem:[#allocation9 + $0xd8] sm:$0xff]
    %v1848 = vld [vmem:[#allocation9 + $0xe0] sm:$0xff]
    %v1849 = vld [vmem:[#allocation9 + $0xe8] sm:$0xff]
    %v1850 = vld [vmem:[#allocation9 + $0xf0] sm:$0xff]
    %v1851 = vld [vmem:[#allocation9 + $0xf8] sm:$0xff]
    %v1852 = vld [vmem:[#allocation9 + $0x100] sm:$0xff]
    %v1853 = vld [vmem:[#allocation9 + $0x108] sm:$0xff]
    %v1854 = vld [vmem:[#allocation9 + $0x110] sm:$0xff]
    %v1855 = vld [vmem:[#allocation9 + $0x118] sm:$0xff]
    %v1856 = vld [vmem:[#allocation9 + $0x120] sm:$0xff]
    %v1857 = vld [vmem:[#allocation9 + $0x128] sm:$0xff]
    %v1858 = vld [vmem:[#allocation9 + $0x130] sm:$0xff]
    %v1859 = vld [vmem:[#allocation9 + $0x138] sm:$0xff]
    %v1860 = vld [vmem:[#allocation9 + $0x140] sm:$0xff]
    %v1861 = vld [vmem:[#allocation9 + $0x148] sm:$0xff]
    %v1862 = vld [vmem:[#allocation9 + $0x150] sm:$0xff]
    %v1863 = vld [vmem:[#allocation9 + $0x158] sm:$0xff]
    %v1864 = vld [vmem:[#allocation9 + $0x160] sm:$0xff]
    %v1865 = vld [vmem:[#allocation9 + $0x168] sm:$0xff]
    %v1866 = vld [vmem:[#allocation9 + $0x170] sm:$0xff]
    %v1867 = vld [vmem:[#allocation9 + $0x178] sm:$0xff]
    %1868 = vmatprep.subr.mxu0 %v1821
    %1869 = vmatpush1.msra.mxu0 %v1820
    %1870 = vmatprep.subr.mxu0 %v1824
    %1871 = vmatpush1.msra.mxu0 %v1823
    %1872 = vmatprep.subr.mxu0 %v1827
    %1873 = vmatpush1.msra.mxu0 %v1826
    %1874 = vmatprep.subr.mxu0 %v1830
    %1875 = vmatpush1.msra.mxu0 %v1829
    %1876 = vmatprep.subr.mxu0 %v1833
    %1877 = vmatpush1.msra.mxu0 %v1832
    %1878 = vmatprep.subr.mxu0 %v1836
    %1879 = vmatpush1.msra.mxu0 %v1835
    %1880 = vmatprep.subr.mxu0 %v1839
    %1881 = vmatpush1.msra.mxu0 %v1838
    %1882 = vmatprep.subr.mxu0 %v1842
    %1883 = vmatpush1.msra.mxu0 %v1841
    %1884 = vmatprep.subr.mxu0 %v1845
    %1885 = vmatpush1.msra.mxu0 %v1844
    %1886 = vmatprep.subr.mxu0 %v1848
    %1887 = vmatpush1.msra.mxu0 %v1847
    %1888 = vmatprep.subr.mxu0 %v1851
    %1889 = vmatpush1.msra.mxu0 %v1850
    %1890 = vmatprep.subr.mxu0 %v1854
    %1891 = vmatpush1.msra.mxu0 %v1853
    %1892 = vmatprep.subr.mxu0 %v1857
    %1893 = vmatpush1.msra.mxu0 %v1856
    %1894 = vmatprep.subr.mxu0 %v1860
    %1895 = vmatpush1.msra.mxu0 %v1859
    %1896 = vmatprep.subr.mxu0 %v1863
    %1897 = vmatpush1.msra.mxu0 %v1862
    %1898 = vmatprep.subr.mxu0 %v1866
    %1899 = vmatpush1.msra.mxu0 %v1865
    %1900 = vmatprep.subr.mxu0 0.0
    %1901 = vmatpush1.msra.mxu0 0.0
    %1902 = vmatprep.subr.mxu0 0.0
    %1903 = vmatpush1.msra.mxu0 0.0
    %1904 = vmatprep.subr.mxu0 0.0
    %1905 = vmatpush1.msra.mxu0 0.0
    %1906 = vmatprep.subr.mxu0 0.0
    %1907 = vmatpush1.msra.mxu0 0.0
    %1908 = vmatprep.subr.mxu0 0.0
    %1909 = vmatpush1.msra.mxu0 0.0
    %1910 = vmatprep.subr.mxu0 0.0
    %1911 = vmatpush1.msra.mxu0 0.0
    %1912 = vmatprep.subr.mxu0 0.0
    %1913 = vmatpush1.msra.mxu0 0.0
    %1914 = vmatprep.subr.mxu0 0.0
    %1915 = vmatpush1.msra.mxu0 0.0
    %1916 = vmatprep.subr.mxu0 0.0
    %1917 = vmatpush1.msra.mxu0 0.0
    %1918 = vmatprep.subr.mxu0 0.0
    %1919 = vmatpush1.msra.mxu0 0.0
    %1920 = vmatprep.subr.mxu0 0.0
    %1921 = vmatpush1.msra.mxu0 0.0
    %1922 = vmatprep.subr.mxu0 0.0
    %1923 = vmatpush1.msra.mxu0 0.0
    %1924 = vmatprep.subr.mxu0 0.0
    %1925 = vmatpush1.msra.mxu0 0.0
    %1926 = vmatprep.subr.mxu0 0.0
    %1927 = vmatpush1.msra.mxu0 0.0
    %1928 = vmatprep.subr.mxu0 0.0
    %1929 = vmatpush1.msra.mxu0 0.0
    %1930 = vmatprep.subr.mxu0 0.0
    %1931 = vmatpush1.msra.mxu0 0.0
    %1932 = vmatprep.mubr.f32.mxu0 0.0
    %1933 = vmatmul.mubr.f32.gmra.mrb[0].mxu0 %v1818
    %v1934 = vpop.f32.mrb[0].mxu0
    %v1935 = vadd.f32 %v331, %v1934
    %v1936 = vpop.f32.mrb[0].mxu0
    %v1937 = vadd.f32 %v335, %v1936
    %1938 = vdwg.mxu0
    %1939 = vmatprep.subr.mxu0 0.0
    %1940 = vmatpush1.msra.mxu0 %v1822
    %1941 = vmatprep.subr.mxu0 0.0
    %1942 = vmatpush1.msra.mxu0 %v1825
    %1943 = vmatprep.subr.mxu0 0.0
    %1944 = vmatpush1.msra.mxu0 %v1828
    %1945 = vmatprep.subr.mxu0 0.0
    %1946 = vmatpush1.msra.mxu0 %v1831
    %1947 = vmatprep.subr.mxu0 0.0
    %1948 = vmatpush1.msra.mxu0 %v1834
    %1949 = vmatprep.subr.mxu0 0.0
    %1950 = vmatpush1.msra.mxu0 %v1837
    %1951 = vmatprep.subr.mxu0 0.0
    %1952 = vmatpush1.msra.mxu0 %v1840
    %1953 = vmatprep.subr.mxu0 0.0
    %1954 = vmatpush1.msra.mxu0 %v1843
    %1955 = vmatprep.subr.mxu0 0.0
    %1956 = vmatpush1.msra.mxu0 %v1846
    %1957 = vmatprep.subr.mxu0 0.0
    %1958 = vmatpush1.msra.mxu0 %v1849
    %1959 = vmatprep.subr.mxu0 0.0
    %1960 = vmatpush1.msra.mxu0 %v1852
    %1961 = vmatprep.subr.mxu0 0.0
    %1962 = vmatpush1.msra.mxu0 %v1855
    %1963 = vmatprep.subr.mxu0 0.0
    %1964 = vmatpush1.msra.mxu0 %v1858
    %1965 = vmatprep.subr.mxu0 0.0
    %1966 = vmatpush1.msra.mxu0 %v1861
    %1967 = vmatprep.subr.mxu0 0.0
    %1968 = vmatpush1.msra.mxu0 %v1864
    %1969 = vmatprep.subr.mxu0 0.0
    %1970 = vmatpush1.msra.mxu0 %v1867
    %1971 = vmatprep.subr.mxu0 0.0
    %1972 = vmatpush1.msra.mxu0 0.0
    %1973 = vmatprep.subr.mxu0 0.0
    %1974 = vmatpush1.msra.mxu0 0.0
    %1975 = vmatprep.subr.mxu0 0.0
    %1976 = vmatpush1.msra.mxu0 0.0
    %1977 = vmatprep.subr.mxu0 0.0
    %1978 = vmatpush1.msra.mxu0 0.0
    %1979 = vmatprep.subr.mxu0 0.0
    %1980 = vmatpush1.msra.mxu0 0.0
    %1981 = vmatprep.subr.mxu0 0.0
    %1982 = vmatpush1.msra.mxu0 0.0
    %1983 = vmatprep.subr.mxu0 0.0
    %1984 = vmatpush1.msra.mxu0 0.0
    %1985 = vmatprep.subr.mxu0 0.0
    %1986 = vmatpush1.msra.mxu0 0.0
    %1987 = vmatprep.subr.mxu0 0.0
    %1988 = vmatpush1.msra.mxu0 0.0
    %1989 = vmatprep.subr.mxu0 0.0
    %1990 = vmatpush1.msra.mxu0 0.0
    %1991 = vmatprep.subr.mxu0 0.0
    %1992 = vmatpush1.msra.mxu0 0.0
    %1993 = vmatprep.subr.mxu0 0.0
    %1994 = vmatpush1.msra.mxu0 0.0
    %1995 = vmatprep.subr.mxu0 0.0
    %1996 = vmatpush1.msra.mxu0 0.0
    %1997 = vmatprep.subr.mxu0 0.0
    %1998 = vmatpush1.msra.mxu0 0.0
    %1999 = vmatprep.subr.mxu0 0.0
    %2000 = vmatpush1.msra.mxu0 0.0
    %2001 = vmatprep.subr.mxu0 0.0
    %2002 = vmatpush1.msra.mxu0 0.0
    %2003 = vmatprep.mubr.f32.mxu0 0.0
    %2004 = vmatmul.mubr.f32.gmra.mrb[0].mxu0 %v1818
    %v2005 = vpop.f32.mrb[0].mxu0
    %v2006 = vadd.f32 %v339, %v2005
    %v2007 = vpop.f32.mrb[0].mxu0
    %2008 = vdwg.mxu0
    %s2009 = scalar_lea.vmem [#allocation3], 7
    %v2010 = vld [vmem:[%s2009] ss:$8 sm:$0x7]
    %v2011 = vadd.f32 %v2010, %v1935
    %v2012 = vxor.u32 %v2011, 2147483648
    %v2013 = vmul.f32 %v2012, 1.442695
    %v2014 = vpow.pop %v2013
    %v2015 = vadd.f32 %v2014, 1.0
    %v2016 = vrcp.pop %v2015
    %v2017 = vmul.f32 1.0, %v2016
    %v2019 = vrot.slane %v2010, 1
    %v2021 = vadd.f32 %v2019, %v1937
    %v2022 = vxor.u32 %v2021, 2147483648
    %v2023 = vmul.f32 %v2022, 1.442695
    %v2024 = vpow.pop %v2023
    %v2025 = vadd.f32 %v2024, 1.0
    %v2026 = vrcp.pop %v2025
    %v2027 = vmul.f32 1.0, %v2026
    %v2028 = vmul.f32 %v2017, %v2006
    %v2029 = vrot.slane %v2010, 2
    %v2031 = vadd.f32 %v2029, %v2028
    %v2032 = vtanh.pop %v2031
    %v2033 = vsub.f32 1.0, %v2027
    %v2034 = vmul.f32 %v2033, %v2032
    %v2035 = vmul.f32 %v2027, %v1818
    %v2036 = vadd.f32 %v2034, %v2035
    %2037 = vst [vmem:[#allocation10 + $0x7] sm:$0x1] %v2036
    %2038 = vst [vmem:[#allocation2] sm:$0x1] %v2036
    // Predicated region
    $region38: #{tpu_custom_call.1} parent=1 // pred_check
      _
    $region39: #{tpu_custom_call.1} parent=1 // pred_check_branch
      %2040 = sbr.rel (0) target = $region41
    $region40: #{tpu_custom_call.1} parent=1 // pred_region
      %s2042 = ssub.s32 128, 128
      %2043 = vsyncadd [#allocation6], %s2042
      %s2045 = sshll.u32 [#allocation10], 4
      %s2046 = int_to_ptr.vmem [resolvable:$true] %s2045
      %2048 = dma.vmem_to_hbm [thread:$0]  %s2046, 128, %s5, [#allocation6]
    $region41: #{tpu_custom_call.1} parent=1 // pred_fallthru
      _
    // Predicated region
    $region42: #{tpu_custom_call.1} parent=1 // pred_check
      _
    $region43: #{tpu_custom_call.1} parent=1 // pred_check_branch
      %2050 = sbr.rel (0) target = $region45
    $region44: #{tpu_custom_call.1} parent=1 // pred_region
      %2051 = dma.done [#allocation6], 128
    $region45: #{tpu_custom_call.1} parent=1 // pred_fallthru
      _
    %2052 = vsyncpa [#allocation5], 1
    %2053 = vsyncpa [#allocation8], 1
    %2054 = vsyncpa [#allocation6], 1

</llo_original>
